<compile_context>
chip_gen: v5e
topology: v5e:2x2
jax: 0.10.0
libtpu: 0.0.40
codegen_flags: <defaults>
</compile_context>

<pallas_src>
import functools
import math
from typing import NamedTuple

import jax
import jax.numpy as jnp
import numpy as np
from jax import lax
from jax.experimental import pallas as pl
from jax.experimental.pallas import tpu as pltpu


def _round_up(x, m):
    return ((x + m - 1) // m) * m


class PackedMHAWeights(NamedTuple):
    wq: jax.Array        # (Din, H*kd_pad)  norm_factor folded in
    wk: jax.Array        # (Din, H*kd_pad)
    wv: jax.Array        # (Din, H*vd_pad)
    wo: jax.Array        # (H*vd_pad, e_pad)
    n_heads: int
    kd_pad: int
    vd_pad: int
    e_pad: int
    embed_dim: int


def pack_mha_weights(w_query, w_key, w_val, w_out, *, compute_dtype=jnp.float32):
    """Pre-pack / pad module weights once (hoisted out of the per-call path).

    Per-head Kd/Vd and E are zero-padded to multiples of 128 so every
    in-kernel head slice / store is (8,128)-tile aligned (at production sizes
    on v6e/v7x prefer multiples of 256 to fill the 256-wide MXU).  The 1/sqrt
    norm factor is folded into W_query.  Everything is cast to compute_dtype
    so all MXU matmuls see narrow operands when compute_dtype=bfloat16.
    """
    H, d_in, kd = w_query.shape
    vd = w_val.shape[2]
    kd_out, e = w_out.shape[1], w_out.shape[2]
    # torch's heads.view(-1, H*val_dim) @ W_out.view(-1, E) only type-checks
    # when key_dim == val_dim; mirror that and pack W_out by val_dim.
    assert kd_out == vd, "W_out second dim must equal val_dim (== key_dim)"

    kd_pad = _round_up(kd, 128)
    vd_pad = _round_up(vd, 128)
    e_pad = _round_up(e, 128)
    norm_factor = 1.0 / math.sqrt(kd)

    def _pack_proj(w, pad_to, scale=1.0):
        # (H, Din, d) -> (Din, H, d) -> zero-pad d -> (Din, H*pad_to)
        w = jnp.transpose(w, (1, 0, 2))
        w = jnp.pad(w, ((0, 0), (0, 0), (0, pad_to - w.shape[2])))
        return (w.reshape(d_in, H * pad_to) * scale).astype(compute_dtype)

    wq = _pack_proj(w_query, kd_pad, norm_factor)
    wk = _pack_proj(w_key, kd_pad)
    wv = _pack_proj(w_val, vd_pad)

    # (H, Vd, E) -> zero-pad Vd and E -> (H*vd_pad, e_pad), head-major rows.
    wo = jnp.pad(w_out, ((0, 0), (0, vd_pad - vd), (0, e_pad - e)))
    wo = wo.reshape(H * vd_pad, e_pad).astype(compute_dtype)

    return PackedMHAWeights(wq, wk, wv, wo, H, kd_pad, vd_pad, e_pad, e)


def mha_kernel(q_ref, k_ref, v_ref, wq_ref, wk_ref, wv_ref, wo_ref,
               out_ref, heads_ref, *, n_heads, kd_pad, vd_pad):
    bt, tq, d_in = q_ref.shape
    _, nk, _ = k_ref.shape
    cdt = wq_ref.dtype               # compute dtype (bf16 on v6e/v7x, or f32)

    q2 = q_ref[...].reshape(bt * tq, d_in).astype(cdt)
    k2 = k_ref[...].reshape(bt * nk, d_in).astype(cdt)
    v2 = v_ref[...].reshape(bt * nk, d_in).astype(cdt)

    # Fused all-head projections: one MXU matmul per input (norm_factor is
    # already folded into wq_ref; per-head segments are 128-lane aligned).
    qa = jnp.dot(q2, wq_ref[...], preferred_element_type=jnp.float32)
    ka = jnp.dot(k2, wk_ref[...], preferred_element_type=jnp.float32)
    va = jnp.dot(v2, wv_ref[...], preferred_element_type=jnp.float32)

    # Cast operands to compute dtype so QK^T and PV also run narrow on the MXU
    # (accumulation stays f32 via preferred_element_type).
    qa = qa.reshape(bt, tq, n_heads * kd_pad).astype(cdt)
    ka = ka.reshape(bt, nk, n_heads * kd_pad).astype(cdt)
    va = va.reshape(bt, nk, n_heads * vd_pad).astype(cdt)

    for h in range(n_heads):          # static unroll; 128-lane aligned slices
        qh = qa[:, :, h * kd_pad:(h + 1) * kd_pad]   # (bt, tq, kd_pad)
        kh = ka[:, :, h * kd_pad:(h + 1) * kd_pad]   # (bt, nk, kd_pad)
        vh = va[:, :, h * vd_pad:(h + 1) * vd_pad]   # (bt, nk, vd_pad)

        # Q @ K^T, batched over bt, contracting the (zero-padded) key dim.
        compat = lax.dot_general(
            qh, kh, (((2,), (2,)), ((0,), (0,))),
            preferred_element_type=jnp.float32)       # (bt, tq, nk)

        m = jnp.max(compat, axis=-1, keepdims=True)
        e = jnp.exp(compat - m)
        inv = pl.reciprocal(jnp.sum(e, axis=-1, keepdims=True), approx=True)
        attn = (e * inv).astype(cdt)

        head = lax.dot_general(
            attn, vh, (((2,), (1,)), ((0,), (0,))),
            preferred_element_type=jnp.float32)       # (bt, tq, vd_pad)

        # Lane-aligned store into the scratch slab (no concat / relayouts).
        heads_ref[:, :, h * vd_pad:(h + 1) * vd_pad] = head.astype(cdt)

    # Single fused output projection over all heads; e_pad is a multiple of
    # 128 so the final store is a full-width unmasked vst.
    heads_packed = heads_ref[...].reshape(bt * tq, n_heads * vd_pad)
    out = jnp.dot(heads_packed, wo_ref[...],
                  preferred_element_type=jnp.float32)  # (bt*tq, e_pad)
    out_ref[...] = out.reshape(bt, tq, -1).astype(out_ref.dtype)


def _estimate_vmem_bytes(block_b, block_q, n_key, d_in, n_heads,
                         kd_pad, vd_pad, e_pad, compute_dtype, out_dtype):
    """Scoped-VMEM budget: 2x pipelined q/k/v/out blocks, resident weights,
    head scratch slab, f32 intermediates, plus headroom (clamped 32..100 MiB)."""
    cb = np.dtype(compute_dtype).itemsize
    ob = np.dtype(out_dtype).itemsize
    q_blk = block_b * block_q * d_in * cb
    kv_blk = block_b * n_key * d_in * cb
    w_bytes = (2 * d_in * n_heads * kd_pad + d_in * n_heads * vd_pad
               + n_heads * vd_pad * e_pad) * cb
    out_blk = block_b * block_q * e_pad * ob
    slab = block_b * block_q * n_heads * vd_pad * cb
    inter_f32 = 4 * (block_b * block_q * n_heads * kd_pad
                     + block_b * n_key * n_heads * (kd_pad + vd_pad)
                     + 2 * block_b * block_q * n_key
                     + block_b * block_q * e_pad)
    est = (2 * q_blk + 4 * kv_blk + 2 * w_bytes + 2 * out_blk
           + slab + 2 * inter_f32)
    return int(min(100 * 2 ** 20, max(32 * 2 ** 20, est + (8 << 20))))


def multi_head_attention(q, k, v, weights: PackedMHAWeights, *,
                         block_b=1, block_q=None, out_dtype=None,
                         return_padded=False):
    """Forward pass of MultiHeadAttention (mask=None path).

    q: (B, Nq, Din); k, v: (B, Nk, Din) (k=None -> q, v=None -> k, as in torch)
    weights: output of pack_mha_weights() (pre-packed once, not per call).
    block_b / block_q: batch / query-row tile per grid step; at production
      shapes pick block_b*block_q >= 256 rows to fill MXU passes and amortize
      the ~0.35us per-grid-step overhead.
    out_dtype: output dtype (e.g. bf16 to halve HBM writeback); default q.dtype.
    return_padded: skip the wrapper-side [:, :, :E] slice copy if the consumer
      can accept the lane-padded output.
    """
    if k is None:
        k = q
    if v is None:
        v = k
    B, n_query, d_in = q.shape
    _, n_key, _ = k.shape
    H = weights.n_heads
    kd_pad, vd_pad, e_pad = weights.kd_pad, weights.vd_pad, weights.e_pad
    compute_dtype = weights.wq.dtype
    out_dtype = q.dtype if out_dtype is None else out_dtype

    if block_q is None:
        block_q = n_query
    assert B % block_b == 0
    assert n_query % block_q == 0
    assert block_q == n_query or block_q % 8 == 0

    qc = q.astype(compute_dtype)
    kc = k.astype(compute_dtype)
    vc = v.astype(compute_dtype)

    kernel = functools.partial(mha_kernel, n_heads=H,
                               kd_pad=kd_pad, vd_pad=vd_pad)
    grid = (B // block_b, n_query // block_q)
    vmem_limit = _estimate_vmem_bytes(block_b, block_q, n_key, d_in, H,
                                      kd_pad, vd_pad, e_pad,
                                      compute_dtype, out_dtype)

    def build(single_buffer_weights):
        w_kwargs = ({"pipeline_mode": pl.Buffered(1)}
                    if single_buffer_weights else {})
        in_specs = [
            pl.BlockSpec((block_b, block_q, d_in), lambda b, i: (b, i, 0)),
            pl.BlockSpec((block_b, n_key, d_in), lambda b, i: (b, 0, 0)),
            pl.BlockSpec((block_b, n_key, d_in), lambda b, i: (b, 0, 0)),
            # Resident weights (constant index); single-buffered when possible
            # to halve the VMEM they hold.
            pl.BlockSpec((d_in, H * kd_pad), lambda b, i: (0, 0), **w_kwargs),
            pl.BlockSpec((d_in, H * kd_pad), lambda b, i: (0, 0), **w_kwargs),
            pl.BlockSpec((d_in, H * vd_pad), lambda b, i: (0, 0), **w_kwargs),
            pl.BlockSpec((H * vd_pad, e_pad), lambda b, i: (0, 0), **w_kwargs),
        ]
        return pl.pallas_call(
            kernel,
            out_shape=jax.ShapeDtypeStruct((B, n_query, e_pad), out_dtype),
            grid=grid,
            in_specs=in_specs,
            out_specs=pl.BlockSpec((block_b, block_q, e_pad),
                                   lambda b, i: (b, i, 0)),
            scratch_shapes=[
                pltpu.VMEM((block_b, block_q, H * vd_pad), compute_dtype)],
            compiler_params=pltpu.CompilerParams(
                dimension_semantics=("parallel", "parallel"),
                vmem_limit_bytes=vmem_limit),
        )

    args = (qc, kc, vc, weights.wq, weights.wk, weights.wv, weights.wo)
    try:
        out_padded = build(single_buffer_weights=True)(*args)
    except Exception:
        # Fallback if pl.Buffered(1) single-buffering is unsupported on this
        # jax build; identical kernel with default double-buffered weights.
        out_padded = build(single_buffer_weights=False)(*args)

    if return_padded:
        return out_padded
    return out_padded[:, :, :weights.embed_dim]


def reference_mha(q, k, v, w_query, w_key, w_val, w_out):
    """Pure-JAX reproduction of the PyTorch forward (mask=None)."""
    H, Din, Kd = w_query.shape
    norm_factor = 1.0 / math.sqrt(Kd)
    Q = jnp.einsum('bqd,hdk->hbqk', q, w_query)
    K = jnp.einsum('bnd,hdk->hbnk', k, w_key)
    V = jnp.einsum('bnd,hdv->hbnv', v, w_val)
    compat = norm_factor * jnp.einsum('hbqk,hbnk->hbqn', Q, K)
    attn = jax.nn.softmax(compat, axis=-1)
    heads = jnp.einsum('hbqn,hbnv->hbqv', attn, V)
    out = jnp.einsum('hbqv,hve->bqe', heads, w_out)
    return out


if __name__ == "__main__":
    # Module config: n_heads=2, input_dim=16, embed_dim=32
    # -> val_dim = key_dim = embed_dim // n_heads = 16
    n_heads, input_dim, embed_dim = 2, 16, 32
    key_dim = val_dim = embed_dim // n_heads
    batch, n_query, graph_size = 2, 8, 8

    key = jax.random.PRNGKey(0)
    kq, kk, kv, kwq, kwk, kwv, kwo = jax.random.split(key, 7)

    q = jax.random.normal(kq, (batch, n_query, input_dim), jnp.float32)
    k = jax.random.normal(kk, (batch, graph_size, input_dim), jnp.float32)
    v = jax.random.normal(kv, (batch, graph_size, input_dim), jnp.float32)

    # Deterministic uniform(-stdv, stdv) init, stdv = 1/sqrt(last dim),
    # mirroring init_parameters().
    def uinit(rng, shape):
        stdv = 1.0 / math.sqrt(shape[-1])
        return jax.random.uniform(rng, shape, jnp.float32, -stdv, stdv)

    w_query = uinit(kwq, (n_heads, input_dim, key_dim))
    w_key = uinit(kwk, (n_heads, input_dim, key_dim))
    w_val = uinit(kwv, (n_heads, input_dim, val_dim))
    w_out = uinit(kwo, (n_heads, key_dim, embed_dim))

    ref = reference_mha(q, k, v, w_query, w_key, w_val, w_out)

    # f32 compute path: only approximation is the EUP reciprocal in softmax.
    packed_f32 = pack_mha_weights(w_query, w_key, w_val, w_out,
                                  compute_dtype=jnp.float32)
    out_f32 = multi_head_attention(q, k, v, packed_f32)
    out_f32 = jax.block_until_ready(out_f32)
    np.testing.assert_allclose(np.asarray(out_f32), np.asarray(ref),
                               rtol=5e-3, atol=5e-3)

    # bf16 MXU-operand path (all five matmuls bf16, f32 accumulation) —
    # the throughput configuration for v5e/v6e/v7x; looser tolerance.
    packed_bf16 = pack_mha_weights(w_query, w_key, w_val, w_out,
                                   compute_dtype=jnp.bfloat16)
    out_bf16 = multi_head_attention(q, k, v, packed_bf16)
    out_bf16 = jax.block_until_ready(out_bf16)
    np.testing.assert_allclose(np.asarray(out_bf16), np.asarray(ref),
                               rtol=5e-2, atol=5e-2)

    print("KERNEL_OK")
</pallas_src>

<mosaic_0001>
module attributes {stable_mosaic.version = 11 : i64} {
  func.func @mha_kernel(%arg0: i32, %arg1: i32, %arg2: memref<1x8x16xf32, #tpu.memory_space<vmem>>, %arg3: memref<1x8x16xf32, #tpu.memory_space<vmem>>, %arg4: memref<1x8x16xf32, #tpu.memory_space<vmem>>, %arg5: memref<16x256xf32, #tpu.memory_space<vmem>>, %arg6: memref<16x256xf32, #tpu.memory_space<vmem>>, %arg7: memref<16x256xf32, #tpu.memory_space<vmem>>, %arg8: memref<256x128xf32, #tpu.memory_space<vmem>>, %arg9: memref<1x8x128xf32, #tpu.memory_space<vmem>>, %arg10: memref<1x8x256xf32, #tpu.memory_space<vmem>>) attributes {dimension_semantics = [#tpu.dimension_semantics<parallel>, #tpu.dimension_semantics<parallel>], iteration_bounds = array<i64: 2, 1>, scalar_prefetch = 0 : i64, scratch_operands = 1 : i64, tpu.core_type = #tpu.core_type<tc>, window_params = [{transform_indices = @transform_0, window_bounds = array<i64: 1, 8, 16>}, {transform_indices = @transform_1, window_bounds = array<i64: 1, 8, 16>}, {transform_indices = @transform_2, window_bounds = array<i64: 1, 8, 16>}, {pipeline_mode = #tpu.pipeline_mode<synchronous>, transform_indices = @transform_3, window_bounds = array<i64: 16, 256>}, {pipeline_mode = #tpu.pipeline_mode<synchronous>, transform_indices = @transform_4, window_bounds = array<i64: 16, 256>}, {pipeline_mode = #tpu.pipeline_mode<synchronous>, transform_indices = @transform_5, window_bounds = array<i64: 16, 256>}, {pipeline_mode = #tpu.pipeline_mode<synchronous>, transform_indices = @transform_6, window_bounds = array<i64: 256, 128>}, {transform_indices = @transform_7, window_bounds = array<i64: 1, 8, 128>}]} {
    %c0 = arith.constant 0 : index
    %c0_0 = arith.constant 0 : index
    %c0_1 = arith.constant 0 : index
    %0 = vector.load %arg2[%c0, %c0_0, %c0_1] : memref<1x8x16xf32, #tpu.memory_space<vmem>>, vector<1x8x16xf32>
    %1 = vector.shape_cast %0 : vector<1x8x16xf32> to vector<8x16xf32>
    %c0_2 = arith.constant 0 : index
    %c0_3 = arith.constant 0 : index
    %c0_4 = arith.constant 0 : index
    %2 = vector.load %arg3[%c0_2, %c0_3, %c0_4] : memref<1x8x16xf32, #tpu.memory_space<vmem>>, vector<1x8x16xf32>
    %3 = vector.shape_cast %2 : vector<1x8x16xf32> to vector<8x16xf32>
    %c0_5 = arith.constant 0 : index
    %c0_6 = arith.constant 0 : index
    %c0_7 = arith.constant 0 : index
    %4 = vector.load %arg4[%c0_5, %c0_6, %c0_7] : memref<1x8x16xf32, #tpu.memory_space<vmem>>, vector<1x8x16xf32>
    %5 = vector.shape_cast %4 : vector<1x8x16xf32> to vector<8x16xf32>
    %c0_8 = arith.constant 0 : index
    %c0_9 = arith.constant 0 : index
    %6 = vector.load %arg5[%c0_8, %c0_9] : memref<16x256xf32, #tpu.memory_space<vmem>>, vector<16x256xf32>
    %cst = arith.constant dense<0.000000e+00> : vector<8x256xf32>
    %7 = tpu.matmul %1, %6, %cst {dimension_numbers = #tpu.dot_dimension_numbers<[1], [0], [0], [1], [0, 0, 1, 1], [], []>} : vector<8x16xf32>, vector<16x256xf32>, vector<8x256xf32> -> vector<8x256xf32>
    %c0_10 = arith.constant 0 : index
    %c0_11 = arith.constant 0 : index
    %8 = vector.load %arg6[%c0_10, %c0_11] : memref<16x256xf32, #tpu.memory_space<vmem>>, vector<16x256xf32>
    %cst_12 = arith.constant dense<0.000000e+00> : vector<8x256xf32>
    %9 = tpu.matmul %3, %8, %cst_12 {dimension_numbers = #tpu.dot_dimension_numbers<[1], [0], [0], [1], [0, 0, 1, 1], [], []>} : vector<8x16xf32>, vector<16x256xf32>, vector<8x256xf32> -> vector<8x256xf32>
    %c0_13 = arith.constant 0 : index
    %c0_14 = arith.constant 0 : index
    %10 = vector.load %arg7[%c0_13, %c0_14] : memref<16x256xf32, #tpu.memory_space<vmem>>, vector<16x256xf32>
    %cst_15 = arith.constant dense<0.000000e+00> : vector<8x256xf32>
    %11 = tpu.matmul %5, %10, %cst_15 {dimension_numbers = #tpu.dot_dimension_numbers<[1], [0], [0], [1], [0, 0, 1, 1], [], []>} : vector<8x16xf32>, vector<16x256xf32>, vector<8x256xf32> -> vector<8x256xf32>
    %12 = vector.shape_cast %7 : vector<8x256xf32> to vector<1x8x256xf32>
    %13 = vector.shape_cast %9 : vector<8x256xf32> to vector<1x8x256xf32>
    %14 = vector.shape_cast %11 : vector<8x256xf32> to vector<1x8x256xf32>
    %15 = vector.extract_strided_slice %12 {offsets = [0, 0, 0], sizes = [1, 8, 128], strides = [1, 1, 1]} : vector<1x8x256xf32> to vector<1x8x128xf32>
    %16 = vector.extract_strided_slice %13 {offsets = [0, 0, 0], sizes = [1, 8, 128], strides = [1, 1, 1]} : vector<1x8x256xf32> to vector<1x8x128xf32>
    %17 = vector.extract_strided_slice %14 {offsets = [0, 0, 0], sizes = [1, 8, 128], strides = [1, 1, 1]} : vector<1x8x256xf32> to vector<1x8x128xf32>
    %cst_16 = arith.constant dense<0.000000e+00> : vector<1x8x8xf32>
    %18 = tpu.matmul %15, %16, %cst_16 {dimension_numbers = #tpu.dot_dimension_numbers<[2], [2], [1], [1], [0, 0, 0, 1, 1, 1], [0], [0]>} : vector<1x8x128xf32>, vector<1x8x128xf32>, vector<1x8x8xf32> -> vector<1x8x8xf32>
    %cst_17 = arith.constant dense<0xFF800000> : vector<1x8xf32>
    %19 = vector.multi_reduction <maximumf>, %18, %cst_17 [2] : vector<1x8x8xf32> to vector<1x8xf32>
    %20 = vector.shape_cast %19 : vector<1x8xf32> to vector<1x8x1xf32>
    %21 = vector.broadcast %20 : vector<1x8x1xf32> to vector<1x8x8xf32>
    %22 = arith.subf %18, %21 : vector<1x8x8xf32>
    %23 = math.exp %22 : vector<1x8x8xf32>
    %cst_18 = arith.constant dense<0.000000e+00> : vector<1x8xf32>
    %24 = vector.multi_reduction <add>, %23, %cst_18 [2] : vector<1x8x8xf32> to vector<1x8xf32>
    %25 = vector.shape_cast %24 : vector<1x8xf32> to vector<1x8x1xf32>
    %26 = tpu.reciprocal %25 {approx = true} : vector<1x8x1xf32> -> vector<1x8x1xf32>
    %27 = vector.broadcast %26 : vector<1x8x1xf32> to vector<1x8x8xf32>
    %28 = arith.mulf %23, %27 : vector<1x8x8xf32>
    %cst_19 = arith.constant dense<0.000000e+00> : vector<1x8x128xf32>
    %29 = tpu.matmul %28, %17, %cst_19 {dimension_numbers = #tpu.dot_dimension_numbers<[2], [1], [1], [2], [0, 0, 0, 1, 1, 2], [0], [0]>} : vector<1x8x8xf32>, vector<1x8x128xf32>, vector<1x8x128xf32> -> vector<1x8x128xf32>
    %c0_20 = arith.constant 0 : index
    %c0_21 = arith.constant 0 : index
    %c0_22 = arith.constant 0 : index
    %30 = vector.load %arg10[%c0_20, %c0_21, %c0_22] : memref<1x8x256xf32, #tpu.memory_space<vmem>>, vector<1x8x128xf32>
    tpu.vector_store %arg10[%c0_20, %c0_21, %c0_22], %29 {strides = array<i32>} : memref<1x8x256xf32, #tpu.memory_space<vmem>>, vector<1x8x128xf32>,
    %31 = vector.extract_strided_slice %12 {offsets = [0, 0, 128], sizes = [1, 8, 128], strides = [1, 1, 1]} : vector<1x8x256xf32> to vector<1x8x128xf32>
    %32 = vector.extract_strided_slice %13 {offsets = [0, 0, 128], sizes = [1, 8, 128], strides = [1, 1, 1]} : vector<1x8x256xf32> to vector<1x8x128xf32>
    %33 = vector.extract_strided_slice %14 {offsets = [0, 0, 128], sizes = [1, 8, 128], strides = [1, 1, 1]} : vector<1x8x256xf32> to vector<1x8x128xf32>
    %cst_23 = arith.constant dense<0.000000e+00> : vector<1x8x8xf32>
    %34 = tpu.matmul %31, %32, %cst_23 {dimension_numbers = #tpu.dot_dimension_numbers<[2], [2], [1], [1], [0, 0, 0, 1, 1, 1], [0], [0]>} : vector<1x8x128xf32>, vector<1x8x128xf32>, vector<1x8x8xf32> -> vector<1x8x8xf32>
    %cst_24 = arith.constant dense<0xFF800000> : vector<1x8xf32>
    %35 = vector.multi_reduction <maximumf>, %34, %cst_24 [2] : vector<1x8x8xf32> to vector<1x8xf32>
    %36 = vector.shape_cast %35 : vector<1x8xf32> to vector<1x8x1xf32>
    %37 = vector.broadcast %36 : vector<1x8x1xf32> to vector<1x8x8xf32>
    %38 = arith.subf %34, %37 : vector<1x8x8xf32>
    %39 = math.exp %38 : vector<1x8x8xf32>
    %cst_25 = arith.constant dense<0.000000e+00> : vector<1x8xf32>
    %40 = vector.multi_reduction <add>, %39, %cst_25 [2] : vector<1x8x8xf32> to vector<1x8xf32>
    %41 = vector.shape_cast %40 : vector<1x8xf32> to vector<1x8x1xf32>
    %42 = tpu.reciprocal %41 {approx = true} : vector<1x8x1xf32> -> vector<1x8x1xf32>
    %43 = vector.broadcast %42 : vector<1x8x1xf32> to vector<1x8x8xf32>
    %44 = arith.mulf %39, %43 : vector<1x8x8xf32>
    %cst_26 = arith.constant dense<0.000000e+00> : vector<1x8x128xf32>
    %45 = tpu.matmul %44, %33, %cst_26 {dimension_numbers = #tpu.dot_dimension_numbers<[2], [1], [1], [2], [0, 0, 0, 1, 1, 2], [0], [0]>} : vector<1x8x8xf32>, vector<1x8x128xf32>, vector<1x8x128xf32> -> vector<1x8x128xf32>
    %c0_27 = arith.constant 0 : index
    %c0_28 = arith.constant 0 : index
    %c128 = arith.constant 128 : index
    %46 = vector.load %arg10[%c0_27, %c0_28, %c128] : memref<1x8x256xf32, #tpu.memory_space<vmem>>, vector<1x8x128xf32>
    tpu.vector_store %arg10[%c0_27, %c0_28, %c128], %45 {strides = array<i32>} : memref<1x8x256xf32, #tpu.memory_space<vmem>>, vector<1x8x128xf32>,
    %c0_29 = arith.constant 0 : index
    %c0_30 = arith.constant 0 : index
    %c0_31 = arith.constant 0 : index
    %47 = vector.load %arg10[%c0_29, %c0_30, %c0_31] : memref<1x8x256xf32, #tpu.memory_space<vmem>>, vector<1x8x256xf32>
    %48 = vector.shape_cast %47 : vector<1x8x256xf32> to vector<8x256xf32>
    %c0_32 = arith.constant 0 : index
    %c0_33 = arith.constant 0 : index
    %49 = vector.load %arg8[%c0_32, %c0_33] : memref<256x128xf32, #tpu.memory_space<vmem>>, vector<256x128xf32>
    %cst_34 = arith.constant dense<0.000000e+00> : vector<8x128xf32>
    %50 = tpu.matmul %48, %49, %cst_34 {dimension_numbers = #tpu.dot_dimension_numbers<[1], [0], [0], [1], [0, 0, 1, 1], [], []>} : vector<8x256xf32>, vector<256x128xf32>, vector<8x128xf32> -> vector<8x128xf32>
    %51 = vector.shape_cast %50 : vector<8x128xf32> to vector<1x8x128xf32>
    %c0_35 = arith.constant 0 : index
    %c0_36 = arith.constant 0 : index
    %c0_37 = arith.constant 0 : index
    %52 = vector.load %arg9[%c0_35, %c0_36, %c0_37] : memref<1x8x128xf32, #tpu.memory_space<vmem>>, vector<1x8x128xf32>
    tpu.vector_store %arg9[%c0_35, %c0_36, %c0_37], %51 {strides = array<i32>} : memref<1x8x128xf32, #tpu.memory_space<vmem>>, vector<1x8x128xf32>,
    return
  }
  func.func @transform_0(%arg0: i32, %arg1: i32) -> (i32, i32, i32) {
    %c0_i32 = arith.constant 0 : i32
    %c0_i32_0 = arith.constant 0 : i32
    return %arg0, %arg1, %c0_i32 : i32, i32, i32
  }
  func.func @transform_1(%arg0: i32, %arg1: i32) -> (i32, i32, i32) {
    %c0_i32 = arith.constant 0 : i32
    %c0_i32_0 = arith.constant 0 : i32
    %c0_i32_1 = arith.constant 0 : i32
    return %arg0, %c0_i32, %c0_i32_0 : i32, i32, i32
  }
  func.func @transform_2(%arg0: i32, %arg1: i32) -> (i32, i32, i32) {
    %c0_i32 = arith.constant 0 : i32
    %c0_i32_0 = arith.constant 0 : i32
    %c0_i32_1 = arith.constant 0 : i32
    return %arg0, %c0_i32, %c0_i32_0 : i32, i32, i32
  }
  func.func @transform_3(%arg0: i32, %arg1: i32) -> (i32, i32) {
    %c0_i32 = arith.constant 0 : i32
    %c0_i32_0 = arith.constant 0 : i32
    %c0_i32_1 = arith.constant 0 : i32
    return %c0_i32, %c0_i32_0 : i32, i32
  }
  func.func @transform_4(%arg0: i32, %arg1: i32) -> (i32, i32) {
    %c0_i32 = arith.constant 0 : i32
    %c0_i32_0 = arith.constant 0 : i32
    %c0_i32_1 = arith.constant 0 : i32
    return %c0_i32, %c0_i32_0 : i32, i32
  }
  func.func @transform_5(%arg0: i32, %arg1: i32) -> (i32, i32) {
    %c0_i32 = arith.constant 0 : i32
    %c0_i32_0 = arith.constant 0 : i32
    %c0_i32_1 = arith.constant 0 : i32
    return %c0_i32, %c0_i32_0 : i32, i32
  }
  func.func @transform_6(%arg0: i32, %arg1: i32) -> (i32, i32) {
    %c0_i32 = arith.constant 0 : i32
    %c0_i32_0 = arith.constant 0 : i32
    %c0_i32_1 = arith.constant 0 : i32
    return %c0_i32, %c0_i32_0 : i32, i32
  }
  func.func @transform_7(%arg0: i32, %arg1: i32) -> (i32, i32, i32) {
    %c0_i32 = arith.constant 0 : i32
    %c0_i32_0 = arith.constant 0 : i32
    return %arg0, %arg1, %c0_i32 : i32, i32, i32
  }
}

module attributes {stable_mosaic.version = 11 : i64} {
  func.func @mha_kernel(%arg0: i32, %arg1: i32, %arg2: memref<1x8x16xf32, #tpu.memory_space<vmem>>, %arg3: memref<1x8x16xf32, #tpu.memory_space<vmem>>, %arg4: memref<1x8x16xf32, #tpu.memory_space<vmem>>, %arg5: memref<16x256xf32, #tpu.memory_space<vmem>>, %arg6: memref<16x256xf32, #tpu.memory_space<vmem>>, %arg7: memref<16x256xf32, #tpu.memory_space<vmem>>, %arg8: memref<256x128xf32, #tpu.memory_space<vmem>>, %arg9: memref<1x8x128xf32, #tpu.memory_space<vmem>>, %arg10: memref<1x8x256xf32, #tpu.memory_space<vmem>>) attributes {dimension_semantics = [#tpu.dimension_semantics<parallel>, #tpu.dimension_semantics<parallel>], iteration_bounds = array<i64: 2, 1>, scalar_prefetch = 0 : i64, scratch_operands = 1 : i64, tpu.core_type = #tpu.core_type<tc>, window_params = [{transform_indices = @transform_0, window_bounds = array<i64: 1, 8, 16>}, {transform_indices = @transform_1, window_bounds = array<i64: 1, 8, 16>}, {transform_indices = @transform_2, window_bounds = array<i64: 1, 8, 16>}, {pipeline_mode = #tpu.pipeline_mode<synchronous>, transform_indices = @transform_3, window_bounds = array<i64: 16, 256>}, {pipeline_mode = #tpu.pipeline_mode<synchronous>, transform_indices = @transform_4, window_bounds = array<i64: 16, 256>}, {pipeline_mode = #tpu.pipeline_mode<synchronous>, transform_indices = @transform_5, window_bounds = array<i64: 16, 256>}, {pipeline_mode = #tpu.pipeline_mode<synchronous>, transform_indices = @transform_6, window_bounds = array<i64: 256, 128>}, {transform_indices = @transform_7, window_bounds = array<i64: 1, 8, 128>}]} {
    %c0 = arith.constant 0 : index
    %c0_0 = arith.constant 0 : index
    %c0_1 = arith.constant 0 : index
    %0 = vector.load %arg2[%c0, %c0_0, %c0_1] : memref<1x8x16xf32, #tpu.memory_space<vmem>>, vector<1x8x16xf32>
    %1 = vector.shape_cast %0 : vector<1x8x16xf32> to vector<8x16xf32>
    %c0_2 = arith.constant 0 : index
    %c0_3 = arith.constant 0 : index
    %c0_4 = arith.constant 0 : index
    %2 = vector.load %arg3[%c0_2, %c0_3, %c0_4] : memref<1x8x16xf32, #tpu.memory_space<vmem>>, vector<1x8x16xf32>
    %3 = vector.shape_cast %2 : vector<1x8x16xf32> to vector<8x16xf32>
    %c0_5 = arith.constant 0 : index
    %c0_6 = arith.constant 0 : index
    %c0_7 = arith.constant 0 : index
    %4 = vector.load %arg4[%c0_5, %c0_6, %c0_7] : memref<1x8x16xf32, #tpu.memory_space<vmem>>, vector<1x8x16xf32>
    %5 = vector.shape_cast %4 : vector<1x8x16xf32> to vector<8x16xf32>
    %c0_8 = arith.constant 0 : index
    %c0_9 = arith.constant 0 : index
    %6 = vector.load %arg5[%c0_8, %c0_9] : memref<16x256xf32, #tpu.memory_space<vmem>>, vector<16x256xf32>
    %cst = arith.constant dense<0.000000e+00> : vector<8x256xf32>
    %7 = tpu.matmul %1, %6, %cst {dimension_numbers = #tpu.dot_dimension_numbers<[1], [0], [0], [1], [0, 0, 1, 1], [], []>} : vector<8x16xf32>, vector<16x256xf32>, vector<8x256xf32> -> vector<8x256xf32>
    %c0_10 = arith.constant 0 : index
    %c0_11 = arith.constant 0 : index
    %8 = vector.load %arg6[%c0_10, %c0_11] : memref<16x256xf32, #tpu.memory_space<vmem>>, vector<16x256xf32>
    %cst_12 = arith.constant dense<0.000000e+00> : vector<8x256xf32>
    %9 = tpu.matmul %3, %8, %cst_12 {dimension_numbers = #tpu.dot_dimension_numbers<[1], [0], [0], [1], [0, 0, 1, 1], [], []>} : vector<8x16xf32>, vector<16x256xf32>, vector<8x256xf32> -> vector<8x256xf32>
    %c0_13 = arith.constant 0 : index
    %c0_14 = arith.constant 0 : index
    %10 = vector.load %arg7[%c0_13, %c0_14] : memref<16x256xf32, #tpu.memory_space<vmem>>, vector<16x256xf32>
    %cst_15 = arith.constant dense<0.000000e+00> : vector<8x256xf32>
    %11 = tpu.matmul %5, %10, %cst_15 {dimension_numbers = #tpu.dot_dimension_numbers<[1], [0], [0], [1], [0, 0, 1, 1], [], []>} : vector<8x16xf32>, vector<16x256xf32>, vector<8x256xf32> -> vector<8x256xf32>
    %12 = vector.shape_cast %7 : vector<8x256xf32> to vector<1x8x256xf32>
    %13 = vector.shape_cast %9 : vector<8x256xf32> to vector<1x8x256xf32>
    %14 = vector.shape_cast %11 : vector<8x256xf32> to vector<1x8x256xf32>
    %15 = vector.extract_strided_slice %12 {offsets = [0, 0, 0], sizes = [1, 8, 128], strides = [1, 1, 1]} : vector<1x8x256xf32> to vector<1x8x128xf32>
    %16 = vector.extract_strided_slice %13 {offsets = [0, 0, 0], sizes = [1, 8, 128], strides = [1, 1, 1]} : vector<1x8x256xf32> to vector<1x8x128xf32>
    %17 = vector.extract_strided_slice %14 {offsets = [0, 0, 0], sizes = [1, 8, 128], strides = [1, 1, 1]} : vector<1x8x256xf32> to vector<1x8x128xf32>
    %cst_16 = arith.constant dense<0.000000e+00> : vector<1x8x8xf32>
    %18 = tpu.matmul %15, %16, %cst_16 {dimension_numbers = #tpu.dot_dimension_numbers<[2], [2], [1], [1], [0, 0, 0, 1, 1, 1], [0], [0]>} : vector<1x8x128xf32>, vector<1x8x128xf32>, vector<1x8x8xf32> -> vector<1x8x8xf32>
    %cst_17 = arith.constant dense<0xFF800000> : vector<1x8xf32>
    %19 = vector.multi_reduction <maximumf>, %18, %cst_17 [2] : vector<1x8x8xf32> to vector<1x8xf32>
    %20 = vector.shape_cast %19 : vector<1x8xf32> to vector<1x8x1xf32>
    %21 = vector.broadcast %20 : vector<1x8x1xf32> to vector<1x8x8xf32>
    %22 = arith.subf %18, %21 : vector<1x8x8xf32>
    %23 = math.exp %22 : vector<1x8x8xf32>
    %cst_18 = arith.constant dense<0.000000e+00> : vector<1x8xf32>
    %24 = vector.multi_reduction <add>, %23, %cst_18 [2] : vector<1x8x8xf32> to vector<1x8xf32>
    %25 = vector.shape_cast %24 : vector<1x8xf32> to vector<1x8x1xf32>
    %26 = tpu.reciprocal %25 {approx = true} : vector<1x8x1xf32> -> vector<1x8x1xf32>
    %27 = vector.broadcast %26 : vector<1x8x1xf32> to vector<1x8x8xf32>
    %28 = arith.mulf %23, %27 : vector<1x8x8xf32>
    %cst_19 = arith.constant dense<0.000000e+00> : vector<1x8x128xf32>
    %29 = tpu.matmul %28, %17, %cst_19 {dimension_numbers = #tpu.dot_dimension_numbers<[2], [1], [1], [2], [0, 0, 0, 1, 1, 2], [0], [0]>} : vector<1x8x8xf32>, vector<1x8x128xf32>, vector<1x8x128xf32> -> vector<1x8x128xf32>
    %c0_20 = arith.constant 0 : index
    %c0_21 = arith.constant 0 : index
    %c0_22 = arith.constant 0 : index
    %30 = vector.load %arg10[%c0_20, %c0_21, %c0_22] : memref<1x8x256xf32, #tpu.memory_space<vmem>>, vector<1x8x128xf32>
    tpu.vector_store %arg10[%c0_20, %c0_21, %c0_22], %29 {strides = array<i32>} : memref<1x8x256xf32, #tpu.memory_space<vmem>>, vector<1x8x128xf32>,
    %31 = vector.extract_strided_slice %12 {offsets = [0, 0, 128], sizes = [1, 8, 128], strides = [1, 1, 1]} : vector<1x8x256xf32> to vector<1x8x128xf32>
    %32 = vector.extract_strided_slice %13 {offsets = [0, 0, 128], sizes = [1, 8, 128], strides = [1, 1, 1]} : vector<1x8x256xf32> to vector<1x8x128xf32>
    %33 = vector.extract_strided_slice %14 {offsets = [0, 0, 128], sizes = [1, 8, 128], strides = [1, 1, 1]} : vector<1x8x256xf32> to vector<1x8x128xf32>
    %cst_23 = arith.constant dense<0.000000e+00> : vector<1x8x8xf32>
    %34 = tpu.matmul %31, %32, %cst_23 {dimension_numbers = #tpu.dot_dimension_numbers<[2], [2], [1], [1], [0, 0, 0, 1, 1, 1], [0], [0]>} : vector<1x8x128xf32>, vector<1x8x128xf32>, vector<1x8x8xf32> -> vector<1x8x8xf32>
    %cst_24 = arith.constant dense<0xFF800000> : vector<1x8xf32>
    %35 = vector.multi_reduction <maximumf>, %34, %cst_24 [2] : vector<1x8x8xf32> to vector<1x8xf32>
    %36 = vector.shape_cast %35 : vector<1x8xf32> to vector<1x8x1xf32>
    %37 = vector.broadcast %36 : vector<1x8x1xf32> to vector<1x8x8xf32>
    %38 = arith.subf %34, %37 : vector<1x8x8xf32>
    %39 = math.exp %38 : vector<1x8x8xf32>
    %cst_25 = arith.constant dense<0.000000e+00> : vector<1x8xf32>
    %40 = vector.multi_reduction <add>, %39, %cst_25 [2] : vector<1x8x8xf32> to vector<1x8xf32>
    %41 = vector.shape_cast %40 : vector<1x8xf32> to vector<1x8x1xf32>
    %42 = tpu.reciprocal %41 {approx = true} : vector<1x8x1xf32> -> vector<1x8x1xf32>
    %43 = vector.broadcast %42 : vector<1x8x1xf32> to vector<1x8x8xf32>
    %44 = arith.mulf %39, %43 : vector<1x8x8xf32>
    %cst_26 = arith.constant dense<0.000000e+00> : vector<1x8x128xf32>
    %45 = tpu.matmul %44, %33, %cst_26 {dimension_numbers = #tpu.dot_dimension_numbers<[2], [1], [1], [2], [0, 0, 0, 1, 1, 2], [0], [0]>} : vector<1x8x8xf32>, vector<1x8x128xf32>, vector<1x8x128xf32> -> vector<1x8x128xf32>
    %c0_27 = arith.constant 0 : index
    %c0_28 = arith.constant 0 : index
    %c128 = arith.constant 128 : index
    %46 = vector.load %arg10[%c0_27, %c0_28, %c128] : memref<1x8x256xf32, #tpu.memory_space<vmem>>, vector<1x8x128xf32>
    tpu.vector_store %arg10[%c0_27, %c0_28, %c128], %45 {strides = array<i32>} : memref<1x8x256xf32, #tpu.memory_space<vmem>>, vector<1x8x128xf32>,
    %c0_29 = arith.constant 0 : index
    %c0_30 = arith.constant 0 : index
    %c0_31 = arith.constant 0 : index
    %47 = vector.load %arg10[%c0_29, %c0_30, %c0_31] : memref<1x8x256xf32, #tpu.memory_space<vmem>>, vector<1x8x256xf32>
    %48 = vector.shape_cast %47 : vector<1x8x256xf32> to vector<8x256xf32>
    %c0_32 = arith.constant 0 : index
    %c0_33 = arith.constant 0 : index
    %49 = vector.load %arg8[%c0_32, %c0_33] : memref<256x128xf32, #tpu.memory_space<vmem>>, vector<256x128xf32>
    %cst_34 = arith.constant dense<0.000000e+00> : vector<8x128xf32>
    %50 = tpu.matmul %48, %49, %cst_34 {dimension_numbers = #tpu.dot_dimension_numbers<[1], [0], [0], [1], [0, 0, 1, 1], [], []>} : vector<8x256xf32>, vector<256x128xf32>, vector<8x128xf32> -> vector<8x128xf32>
    %51 = vector.shape_cast %50 : vector<8x128xf32> to vector<1x8x128xf32>
    %c0_35 = arith.constant 0 : index
    %c0_36 = arith.constant 0 : index
    %c0_37 = arith.constant 0 : index
    %52 = vector.load %arg9[%c0_35, %c0_36, %c0_37] : memref<1x8x128xf32, #tpu.memory_space<vmem>>, vector<1x8x128xf32>
    tpu.vector_store %arg9[%c0_35, %c0_36, %c0_37], %51 {strides = array<i32>} : memref<1x8x128xf32, #tpu.memory_space<vmem>>, vector<1x8x128xf32>,
    return
  }
  func.func @transform_0(%arg0: i32, %arg1: i32) -> (i32, i32, i32) {
    %c0_i32 = arith.constant 0 : i32
    %c0_i32_0 = arith.constant 0 : i32
    return %arg0, %arg1, %c0_i32 : i32, i32, i32
  }
  func.func @transform_1(%arg0: i32, %arg1: i32) -> (i32, i32, i32) {
    %c0_i32 = arith.constant 0 : i32
    %c0_i32_0 = arith.constant 0 : i32
    %c0_i32_1 = arith.constant 0 : i32
    return %arg0, %c0_i32, %c0_i32_0 : i32, i32, i32
  }
  func.func @transform_2(%arg0: i32, %arg1: i32) -> (i32, i32, i32) {
    %c0_i32 = arith.constant 0 : i32
    %c0_i32_0 = arith.constant 0 : i32
    %c0_i32_1 = arith.constant 0 : i32
    return %arg0, %c0_i32, %c0_i32_0 : i32, i32, i32
  }
  func.func @transform_3(%arg0: i32, %arg1: i32) -> (i32, i32) {
    %c0_i32 = arith.constant 0 : i32
    %c0_i32_0 = arith.constant 0 : i32
    %c0_i32_1 = arith.constant 0 : i32
    return %c0_i32, %c0_i32_0 : i32, i32
  }
  func.func @transform_4(%arg0: i32, %arg1: i32) -> (i32, i32) {
    %c0_i32 = arith.constant 0 : i32
    %c0_i32_0 = arith.constant 0 : i32
    %c0_i32_1 = arith.constant 0 : i32
    return %c0_i32, %c0_i32_0 : i32, i32
  }
  func.func @transform_5(%arg0: i32, %arg1: i32) -> (i32, i32) {
    %c0_i32 = arith.constant 0 : i32
    %c0_i32_0 = arith.constant 0 : i32
    %c0_i32_1 = arith.constant 0 : i32
    return %c0_i32, %c0_i32_0 : i32, i32
  }
  func.func @transform_6(%arg0: i32, %arg1: i32) -> (i32, i32) {
    %c0_i32 = arith.constant 0 : i32
    %c0_i32_0 = arith.constant 0 : i32
    %c0_i32_1 = arith.constant 0 : i32
    return %c0_i32, %c0_i32_0 : i32, i32
  }
  func.func @transform_7(%arg0: i32, %arg1: i32) -> (i32, i32, i32) {
    %c0_i32 = arith.constant 0 : i32
    %c0_i32_0 = arith.constant 0 : i32
    return %arg0, %arg1, %c0_i32 : i32, i32, i32
  }
}

</mosaic_0001>

<llo_original>
// kernel: tpu_custom_call.1
$region0: #{tpu_custom_call.1}
  #allocation0 [shape = 'u32[]', space=smem, size = 0x4, offset = 0x4, fixed_abs, tag = 'smem constant byte address 0x4 - core index']
  #allocation1 [shape = 'u32[72,128]{1,0:T(1,128)}', space=vmem, size = 0x9000, scoped, tag = 'internal scratch']
  #allocation2 [shape = 'f32[1,8,256]{2,1,0:T(8,128)}', space=vmem, size = 0x2000, scoped, tag = 'scratch operand']
  %s0 = inlined_call_operand.hbm [shape: f32[2,8,16], index: 0, kind: input, shape index: {}]
  %s1 = inlined_call_operand.hbm [shape: f32[2,8,16], index: 1, kind: input, shape index: {}]
  %s2 = inlined_call_operand.hbm [shape: f32[2,8,16], index: 2, kind: input, shape index: {}]
  %s3 = inlined_call_operand.hbm [shape: f32[16,256], index: 3, kind: input, shape index: {}]
  %s4 = inlined_call_operand.hbm [shape: f32[16,256], index: 4, kind: input, shape index: {}]
  %s5 = inlined_call_operand.hbm [shape: f32[16,256], index: 5, kind: input, shape index: {}]
  %s6 = inlined_call_operand.hbm [shape: f32[256,128], index: 6, kind: input, shape index: {}]
  %s7 = inlined_call_operand.hbm [shape: f32[2,8,128], index: 7, kind: output, shape index: {}]
  %s8 = sld [smem:[#allocation0]]
  $region89: #{tpu_custom_call.1} parent=0
    _
  %s10 = ssub.s32 1, %s8
  %s11 = scalar_select 0, %s10, %s8
  $region1: #{tpu_custom_call.1} parent=0
    #allocation3 [shape = 'u8[8192]{0}', space=vmem, size = 0x2000, scoped, tag = 'input window, operand 0']
    #allocation4 [shape = 's32[2]{0}', space=sflag, size = 0x8, scoped, tag = 'scoped memory for tpu_custom_call.1']
    #allocation5 [shape = 's32[2]{0}', space=sflag, size = 0x8, scoped, tag = 'scoped memory for tpu_custom_call.1']
    #allocation6 [shape = 'u8[8192]{0}', space=vmem, size = 0x2000, scoped, tag = 'input window, operand 1']
    #allocation7 [shape = 's32[2]{0}', space=sflag, size = 0x8, scoped, tag = 'scoped memory for tpu_custom_call.1']
    #allocation8 [shape = 'u8[8192]{0}', space=vmem, size = 0x2000, scoped, tag = 'input window, operand 2']
    #allocation9 [shape = 'u8[16384]{0}', space=vmem, size = 0x4000, scoped, tag = 'input window, operand 3, single buffered']
    #allocation10 [shape = 's32[1]{0}', space=sflag, size = 0x4, scoped, tag = 'scoped memory for tpu_custom_call.1']
    #allocation11 [shape = 'u8[16384]{0}', space=vmem, size = 0x4000, scoped, tag = 'input window, operand 4, single buffered']
    #allocation12 [shape = 'u8[16384]{0}', space=vmem, size = 0x4000, scoped, tag = 'input window, operand 5, single buffered']
    #allocation13 [shape = 's32[1]{0}', space=sflag, size = 0x4, scoped, tag = 'scoped memory for tpu_custom_call.1']
    #allocation14 [shape = 'u8[131072]{0}', space=vmem, size = 0x20000, scoped, tag = 'input window, operand 6, single buffered']
    #allocation15 [shape = 'u8[8192]{0}', space=vmem, size = 0x2000, scoped, tag = 'output window, operand 0']
    %12 = vsyncpa [#allocation4], 0
    %s13 = scalar_lea.sflag [#allocation4], 1
    %14 = vsyncpa %s13, 0
    %15 = vsyncpa [#allocation7], 0
    %s16 = scalar_lea.sflag [#allocation7], 1
    %17 = vsyncpa %s16, 0
    %18 = vsyncpa [#allocation10], 0
    %19 = vsyncpa [#allocation13], 0
    %20 = vsyncpa [#allocation5], 0
    %s21 = scalar_lea.sflag [#allocation5], 1
    %22 = vsyncpa %s21, 0
    loop: start=0, step=1, limit=4
    $region2: #{tpu_custom_call.1} parent=1 // loop_pre_header
      _
    $region3: #{tpu_custom_call.1} parent=1 // loop_header
      %s24 = sphi 0, %s28
      %p25 = scmp.ge.s32.totalorder %s24, 4
      %s31 = sphi 0, %s43
      %s32 = sphi 0, %s39
      %s33 = sphi 0, %s31
      %s34 = sphi 0, %s32
      %s35 = sphi 0, %s33
      %s36 = sphi 0, %s34
      %s48 = sphi 0, %s50
      %s51 = sphi 0, %s48
      %s52 = sphi 0, %s51
      %s68 = sphi 0, %s52
      %s74 = sphi 0, %s76
      %s77 = sphi 0, %s74
      %s78 = sphi 0, %s77
      %s94 = sphi 0, %s78
      %s100 = sphi 0, %s102
      %s103 = sphi 0, %s100
      %s104 = sphi 0, %s103
      %s120 = sphi 0, %s104
      %s124 = sphi 0, %s124
      %s126 = sphi 0, %s124
      %s127 = sphi 0, %s126
      %s141 = sphi 0, %s127
      %s145 = sphi 0, %s145
      %s147 = sphi 0, %s145
      %s148 = sphi 0, %s147
      %s162 = sphi 0, %s148
      %s166 = sphi 0, %s166
      %s168 = sphi 0, %s166
      %s169 = sphi 0, %s168
      %s183 = sphi 0, %s169
      %s187 = sphi 0, %s187
      %s189 = sphi 0, %s187
      %s190 = sphi 0, %s189
      %s204 = sphi 0, %s190
      %s212 = sphi 0, %s214
      %s215 = sphi 0, %s212
      %s216 = sphi 0, %s215
      %s232 = sphi 0, %s216
    $region4: #{tpu_custom_call.1} parent=1 // loop_header_branch
      %27 = sbr.rel (%p25) target = $region8
    $region5: #{tpu_custom_call.1} parent=1 // loop_body
      %s29 = ssub.s32 %s24, 1
      %s30 = ssub.s32 %s24, 2
      %s37 = sadd.s32 1, %s32
      %p38 = scmp.ge.s32.totalorder %s37, 1
      %s39 = scalar_select %p38, 0, %s37
      %s40 = sadd.s32 1, %s31
      %s41 = scalar_select %p38, %s40, %s31
      %p42 = scmp.ge.s32.totalorder %s41, 2
      %s43 = scalar_select %p42, 0, %s41
      %s44 = ssub.s32 %s31, %s43
      %s45 = ssub.s32 %s32, %s39
      %s46 = sor.u32 %s44, %s45
      %p47 = scmp.eq.s32.totalorder %s46, 0
      %s49 = sadd.s32 %s48, 1
      %s50 = scalar_select %p47, %s48, %s49
      %p53 = pneg %p47
      %p54 = scmp.eq.s32.totalorder %s24, 1
      %p55 = por %p53, %p54
      %p56 = scmp.ne.s32.totalorder %s48, %s51
      %p57 = scmp.eq.s32.totalorder %s24, 0
      %p58 = por %p56, %p57
      %p59 = scmp.ne.s32.totalorder %s48, %s51
      %p60 = scmp.eq.s32.totalorder %s29, 1
      %p61 = por %p59, %p60
      %p62 = scmp.ne.s32.totalorder %s51, %s52
      %p63 = scmp.eq.s32.totalorder %s29, 0
      %p64 = por %p62, %p63
      %p65 = scmp.ne.s32.totalorder %s51, %s52
      %p66 = scmp.eq.s32.totalorder %s30, 1
      %p67 = por %p65, %p66
      %p69 = scmp.ne.s32.totalorder %s52, %s68
      %p70 = scmp.eq.s32.totalorder %s30, 0
      %p71 = por %p69, %p70
      %s72 = ssub.s32 %s31, %s43
      %p73 = scmp.eq.s32.totalorder %s72, 0
      %s75 = sadd.s32 %s74, 1
      %s76 = scalar_select %p73, %s74, %s75
      %p79 = pneg %p73
      %p80 = scmp.eq.s32.totalorder %s24, 1
      %p81 = por %p79, %p80
      %p82 = scmp.ne.s32.totalorder %s74, %s77
      %p83 = scmp.eq.s32.totalorder %s24, 0
      %p84 = por %p82, %p83
      %p85 = scmp.ne.s32.totalorder %s74, %s77
      %p86 = scmp.eq.s32.totalorder %s29, 1
      %p87 = por %p85, %p86
      %p88 = scmp.ne.s32.totalorder %s77, %s78
      %p89 = scmp.eq.s32.totalorder %s29, 0
      %p90 = por %p88, %p89
      %p91 = scmp.ne.s32.totalorder %s77, %s78
      %p92 = scmp.eq.s32.totalorder %s30, 1
      %p93 = por %p91, %p92
      %p95 = scmp.ne.s32.totalorder %s78, %s94
      %p96 = scmp.eq.s32.totalorder %s30, 0
      %p97 = por %p95, %p96
      %s98 = ssub.s32 %s31, %s43
      %p99 = scmp.eq.s32.totalorder %s98, 0
      %s101 = sadd.s32 %s100, 1
      %s102 = scalar_select %p99, %s100, %s101
      %p105 = pneg %p99
      %p106 = scmp.eq.s32.totalorder %s24, 1
      %p107 = por %p105, %p106
      %p108 = scmp.ne.s32.totalorder %s100, %s103
      %p109 = scmp.eq.s32.totalorder %s24, 0
      %p110 = por %p108, %p109
      %p111 = scmp.ne.s32.totalorder %s100, %s103
      %p112 = scmp.eq.s32.totalorder %s29, 1
      %p113 = por %p111, %p112
      %p114 = scmp.ne.s32.totalorder %s103, %s104
      %p115 = scmp.eq.s32.totalorder %s29, 0
      %p116 = por %p114, %p115
      %p117 = scmp.ne.s32.totalorder %s103, %s104
      %p118 = scmp.eq.s32.totalorder %s30, 1
      %p119 = por %p117, %p118
      %p121 = scmp.ne.s32.totalorder %s104, %s120
      %p122 = scmp.eq.s32.totalorder %s30, 0
      %p123 = por %p121, %p122
      %s125 = sadd.s32 %s124, 1
      %p128 = scmp.eq.s32.totalorder %s24, 1
      %p129 = scmp.ne.s32.totalorder %s124, %s126
      %p130 = scmp.eq.s32.totalorder %s24, 0
      %p131 = por %p129, %p130
      %p132 = scmp.ne.s32.totalorder %s124, %s126
      %p133 = scmp.eq.s32.totalorder %s29, 1
      %p134 = por %p132, %p133
      %p135 = scmp.ne.s32.totalorder %s126, %s127
      %p136 = scmp.eq.s32.totalorder %s29, 0
      %p137 = por %p135, %p136
      %p138 = scmp.ne.s32.totalorder %s126, %s127
      %p139 = scmp.eq.s32.totalorder %s30, 1
      %p140 = por %p138, %p139
      %p142 = scmp.ne.s32.totalorder %s127, %s141
      %p143 = scmp.eq.s32.totalorder %s30, 0
      %p144 = por %p142, %p143
      %s146 = sadd.s32 %s145, 1
      %p149 = scmp.eq.s32.totalorder %s24, 1
      %p150 = scmp.ne.s32.totalorder %s145, %s147
      %p151 = scmp.eq.s32.totalorder %s24, 0
      %p152 = por %p150, %p151
      %p153 = scmp.ne.s32.totalorder %s145, %s147
      %p154 = scmp.eq.s32.totalorder %s29, 1
      %p155 = por %p153, %p154
      %p156 = scmp.ne.s32.totalorder %s147, %s148
      %p157 = scmp.eq.s32.totalorder %s29, 0
      %p158 = por %p156, %p157
      %p159 = scmp.ne.s32.totalorder %s147, %s148
      %p160 = scmp.eq.s32.totalorder %s30, 1
      %p161 = por %p159, %p160
      %p163 = scmp.ne.s32.totalorder %s148, %s162
      %p164 = scmp.eq.s32.totalorder %s30, 0
      %p165 = por %p163, %p164
      %s167 = sadd.s32 %s166, 1
      %p170 = scmp.eq.s32.totalorder %s24, 1
      %p171 = scmp.ne.s32.totalorder %s166, %s168
      %p172 = scmp.eq.s32.totalorder %s24, 0
      %p173 = por %p171, %p172
      %p174 = scmp.ne.s32.totalorder %s166, %s168
      %p175 = scmp.eq.s32.totalorder %s29, 1
      %p176 = por %p174, %p175
      %p177 = scmp.ne.s32.totalorder %s168, %s169
      %p178 = scmp.eq.s32.totalorder %s29, 0
      %p179 = por %p177, %p178
      %p180 = scmp.ne.s32.totalorder %s168, %s169
      %p181 = scmp.eq.s32.totalorder %s30, 1
      %p182 = por %p180, %p181
      %p184 = scmp.ne.s32.totalorder %s169, %s183
      %p185 = scmp.eq.s32.totalorder %s30, 0
      %p186 = por %p184, %p185
      %s188 = sadd.s32 %s187, 1
      %p191 = scmp.eq.s32.totalorder %s24, 1
      %p192 = scmp.ne.s32.totalorder %s187, %s189
      %p193 = scmp.eq.s32.totalorder %s24, 0
      %p194 = por %p192, %p193
      %p195 = scmp.ne.s32.totalorder %s187, %s189
      %p196 = scmp.eq.s32.totalorder %s29, 1
      %p197 = por %p195, %p196
      %p198 = scmp.ne.s32.totalorder %s189, %s190
      %p199 = scmp.eq.s32.totalorder %s29, 0
      %p200 = por %p198, %p199
      %p201 = scmp.ne.s32.totalorder %s189, %s190
      %p202 = scmp.eq.s32.totalorder %s30, 1
      %p203 = por %p201, %p202
      %p205 = scmp.ne.s32.totalorder %s190, %s204
      %p206 = scmp.eq.s32.totalorder %s30, 0
      %p207 = por %p205, %p206
      %s208 = ssub.s32 %s31, %s43
      %s209 = ssub.s32 %s32, %s39
      %s210 = sor.u32 %s208, %s209
      %p211 = scmp.eq.s32.totalorder %s210, 0
      %s213 = sadd.s32 %s212, 1
      %s214 = scalar_select %p211, %s212, %s213
      %p217 = pneg %p211
      %p218 = scmp.eq.s32.totalorder %s24, 1
      %p219 = por %p217, %p218
      %p220 = scmp.ne.s32.totalorder %s212, %s215
      %p221 = scmp.eq.s32.totalorder %s24, 0
      %p222 = por %p220, %p221
      %p223 = scmp.ne.s32.totalorder %s212, %s215
      %p224 = scmp.eq.s32.totalorder %s29, 1
      %p225 = por %p223, %p224
      %p226 = scmp.ne.s32.totalorder %s215, %s216
      %p227 = scmp.eq.s32.totalorder %s29, 0
      %p228 = por %p226, %p227
      %p229 = scmp.ne.s32.totalorder %s215, %s216
      %p230 = scmp.eq.s32.totalorder %s30, 1
      %p231 = por %p229, %p230
      %p233 = scmp.ne.s32.totalorder %s216, %s232
      %p234 = scmp.eq.s32.totalorder %s30, 0
      %p235 = por %p233, %p234
      %p236 = scmp.le.s32.totalorder 1, %s24
      %p237 = scmp.lt.s32.totalorder %s24, 3
      %p238 = pnand %p236, %p237
      %p239 = pneg %p238
      // Predicated region
      $region9: #{tpu_custom_call.1} parent=5 // pred_check
        _
      $region10: #{tpu_custom_call.1} parent=5 // pred_check_branch
        %241 = sbr.rel (%p238) target = $region12
      $region11: #{tpu_custom_call.1} parent=5 // pred_region
        %s242 = ssub.s32 %s24, 1
        // Predicated region
        $region13: #{tpu_custom_call.1} parent=11 // pred_check
          %p243 = pneg %p137
        $region14: #{tpu_custom_call.1} parent=11 // pred_check_branch
          %245 = sbr.rel (%p243) target = $region16
        $region15: #{tpu_custom_call.1} parent=11 // pred_region
          %247 = vsyncadd [#allocation10], 0
          %s248 = sshll.u32 %s3, 4
          %s249 = int_to_ptr.hbm [resolvable:$true] %s248
          %s250 = sshll.u32 [#allocation9], 4
          %s251 = int_to_ptr.vmem [resolvable:$true] %s250
          %256 = dma.hbm_to_vmem [thread:$0]  %s249, 512, %s251, [#allocation10], 256, 256, 16
        $region16: #{tpu_custom_call.1} parent=11 // pred_fallthru
          _
        // Predicated region
        $region17: #{tpu_custom_call.1} parent=11 // pred_check
          %p257 = pneg %p158
        $region18: #{tpu_custom_call.1} parent=11 // pred_check_branch
          %259 = sbr.rel (%p257) target = $region20
        $region19: #{tpu_custom_call.1} parent=11 // pred_region
          %261 = vsyncadd [#allocation10], 0
          %s262 = sshll.u32 %s4, 4
          %s263 = int_to_ptr.hbm [resolvable:$true] %s262
          %s264 = sshll.u32 [#allocation11], 4
          %s265 = int_to_ptr.vmem [resolvable:$true] %s264
          %270 = dma.hbm_to_vmem [thread:$0]  %s263, 512, %s265, [#allocation10], 256, 256, 16
        $region20: #{tpu_custom_call.1} parent=11 // pred_fallthru
          _
        // Predicated region
        $region21: #{tpu_custom_call.1} parent=11 // pred_check
          %p271 = pneg %p179
        $region22: #{tpu_custom_call.1} parent=11 // pred_check_branch
          %273 = sbr.rel (%p271) target = $region24
        $region23: #{tpu_custom_call.1} parent=11 // pred_region
          %275 = vsyncadd [#allocation13], 0
          %s276 = sshll.u32 %s5, 4
          %s277 = int_to_ptr.hbm [resolvable:$true] %s276
          %s278 = sshll.u32 [#allocation12], 4
          %s279 = int_to_ptr.vmem [resolvable:$true] %s278
          %284 = dma.hbm_to_vmem [thread:$0]  %s277, 512, %s279, [#allocation13], 256, 256, 16
        $region24: #{tpu_custom_call.1} parent=11 // pred_fallthru
          _
        // Predicated region
        $region25: #{tpu_custom_call.1} parent=11 // pred_check
          %p285 = pneg %p200
        $region26: #{tpu_custom_call.1} parent=11 // pred_check_branch
          %287 = sbr.rel (%p285) target = $region28
        $region27: #{tpu_custom_call.1} parent=11 // pred_region
          %289 = vsyncadd [#allocation13], 0
          %s290 = sshll.u32 %s6, 4
          %s291 = int_to_ptr.hbm [resolvable:$true] %s290
          %s292 = sshll.u32 [#allocation14], 4
          %s293 = int_to_ptr.vmem [resolvable:$true] %s292
          %298 = dma.hbm_to_vmem [thread:$0]  %s291, 4096, %s293, [#allocation13], 128, 128, 8
        $region28: #{tpu_custom_call.1} parent=11 // pred_fallthru
          _
      $region12: #{tpu_custom_call.1} parent=5 // pred_fallthru
        _
      %p299 = scmp.lt.s32.totalorder %s24, 2
      // Predicated region
      $region29: #{tpu_custom_call.1} parent=5 // pred_check
        %p300 = pneg %p299
      $region30: #{tpu_custom_call.1} parent=5 // pred_check_branch
        %302 = sbr.rel (%p300) target = $region32
      $region31: #{tpu_custom_call.1} parent=5 // pred_region
        // Predicated region
        $region33: #{tpu_custom_call.1} parent=31 // pred_check
          %p303 = pneg %p58
        $region34: #{tpu_custom_call.1} parent=31 // pred_check_branch
          %305 = sbr.rel (%p303) target = $region36
        $region35: #{tpu_custom_call.1} parent=31 // pred_region
          %s306 = sand.u32 %s48, 1
          %s307 = scalar_lea.sflag [#allocation4], %s306
          %s308 = sand.u32 %s48, 1
          %s309 = smul.addr %s308, 8
          %s310 = scalar_lea.vmem [#allocation3], %s309
          %312 = vsyncadd %s307, 0
          %s313 = sadd.s32 %s32, %s31
          %s314 = smul.addr %s313, 8
          %s315 = scalar_lea.hbm %s0, %s314
          %s317 = sshll.u32 %s315, 4
          %s318 = int_to_ptr.hbm [resolvable:$true] %s317
          %s319 = sshll.u32 %s310, 4
          %s320 = int_to_ptr.vmem [resolvable:$true] %s319
          %322 = dma.hbm_to_vmem [thread:$0]  %s318, 128, %s320, %s307
        $region36: #{tpu_custom_call.1} parent=31 // pred_fallthru
          _
        // Predicated region
        $region37: #{tpu_custom_call.1} parent=31 // pred_check
          %p323 = pneg %p84
        $region38: #{tpu_custom_call.1} parent=31 // pred_check_branch
          %325 = sbr.rel (%p323) target = $region40
        $region39: #{tpu_custom_call.1} parent=31 // pred_region
          %s326 = sand.u32 %s24, 1
          %s327 = scalar_lea.sflag [#allocation7], %s326
          %s328 = sand.u32 %s74, 1
          %s329 = smul.addr %s328, 8
          %s330 = scalar_lea.vmem [#allocation6], %s329
          %332 = vsyncadd %s327, 0
          %s333 = smul.addr %s31, 8
          %s334 = scalar_lea.hbm %s1, %s333
          %s336 = sshll.u32 %s334, 4
          %s337 = int_to_ptr.hbm [resolvable:$true] %s336
          %s338 = sshll.u32 %s330, 4
          %s339 = int_to_ptr.vmem [resolvable:$true] %s338
          %341 = dma.hbm_to_vmem [thread:$0]  %s337, 128, %s339, %s327
        $region40: #{tpu_custom_call.1} parent=31 // pred_fallthru
          _
        // Predicated region
        $region41: #{tpu_custom_call.1} parent=31 // pred_check
          %p342 = pneg %p110
        $region42: #{tpu_custom_call.1} parent=31 // pred_check_branch
          %344 = sbr.rel (%p342) target = $region44
        $region43: #{tpu_custom_call.1} parent=31 // pred_region
          %s345 = sand.u32 %s24, 1
          %s346 = scalar_lea.sflag [#allocation7], %s345
          %s347 = sand.u32 %s100, 1
          %s348 = smul.addr %s347, 8
          %s349 = scalar_lea.vmem [#allocation8], %s348
          %351 = vsyncadd %s346, 0
          %s352 = smul.addr %s31, 8
          %s353 = scalar_lea.hbm %s2, %s352
          %s355 = sshll.u32 %s353, 4
          %s356 = int_to_ptr.hbm [resolvable:$true] %s355
          %s357 = sshll.u32 %s349, 4
          %s358 = int_to_ptr.vmem [resolvable:$true] %s357
          %360 = dma.hbm_to_vmem [thread:$0]  %s356, 128, %s358, %s346
        $region44: #{tpu_custom_call.1} parent=31 // pred_fallthru
          _
      $region32: #{tpu_custom_call.1} parent=5 // pred_fallthru
        _
      %p361 = scmp.le.s32.totalorder 1, %s24
      %p362 = scmp.lt.s32.totalorder %s24, 3
      %p363 = pnand %p361, %p362
      %p364 = pneg %p363
      // Predicated region
      $region45: #{tpu_custom_call.1} parent=5 // pred_check
        _
      $region46: #{tpu_custom_call.1} parent=5 // pred_check_branch
        %366 = sbr.rel (%p363) target = $region48
      $region47: #{tpu_custom_call.1} parent=5 // pred_region
        %s367 = ssub.s32 %s24, 1
        %s368 = sand.u32 %s51, 1
        %s369 = scalar_lea.sflag [#allocation4], %s368
        %s370 = sand.u32 %s51, 1
        %s371 = smul.addr %s370, 8
        %s372 = scalar_lea.vmem [#allocation3], %s371
        // Predicated region
        $region49: #{tpu_custom_call.1} parent=47 // pred_check
          %p373 = pneg %p64
        $region50: #{tpu_custom_call.1} parent=47 // pred_check_branch
          %375 = sbr.rel (%p373) target = $region52
        $region51: #{tpu_custom_call.1} parent=47 // pred_region
          %377 = dma.done %s369, 128
        $region52: #{tpu_custom_call.1} parent=47 // pred_fallthru
          _
        %s378 = sand.u32 %s29, 1
        %s379 = scalar_lea.sflag [#allocation7], %s378
        %s380 = sand.u32 %s77, 1
        %s381 = smul.addr %s380, 8
        %s382 = scalar_lea.vmem [#allocation6], %s381
        // Predicated region
        $region53: #{tpu_custom_call.1} parent=47 // pred_check
          %p383 = pneg %p90
        $region54: #{tpu_custom_call.1} parent=47 // pred_check_branch
          %385 = sbr.rel (%p383) target = $region56
        $region55: #{tpu_custom_call.1} parent=47 // pred_region
          %387 = dma.done %s379, 128
        $region56: #{tpu_custom_call.1} parent=47 // pred_fallthru
          _
        %s388 = sand.u32 %s29, 1
        %s389 = scalar_lea.sflag [#allocation7], %s388
        %s390 = sand.u32 %s103, 1
        %s391 = smul.addr %s390, 8
        %s392 = scalar_lea.vmem [#allocation8], %s391
        // Predicated region
        $region57: #{tpu_custom_call.1} parent=47 // pred_check
          %p393 = pneg %p116
        $region58: #{tpu_custom_call.1} parent=47 // pred_check_branch
          %395 = sbr.rel (%p393) target = $region60
        $region59: #{tpu_custom_call.1} parent=47 // pred_region
          %397 = dma.done %s389, 128
        $region60: #{tpu_custom_call.1} parent=47 // pred_fallthru
          _
        // Predicated region
        $region61: #{tpu_custom_call.1} parent=47 // pred_check
          %p398 = pneg %p137
        $region62: #{tpu_custom_call.1} parent=47 // pred_check_branch
          %400 = sbr.rel (%p398) target = $region64
        $region63: #{tpu_custom_call.1} parent=47 // pred_region
          %402 = dma.done [#allocation10], 512
        $region64: #{tpu_custom_call.1} parent=47 // pred_fallthru
          _
        // Predicated region
        $region65: #{tpu_custom_call.1} parent=47 // pred_check
          %p403 = pneg %p158
        $region66: #{tpu_custom_call.1} parent=47 // pred_check_branch
          %405 = sbr.rel (%p403) target = $region68
        $region67: #{tpu_custom_call.1} parent=47 // pred_region
          %407 = dma.done [#allocation10], 512
        $region68: #{tpu_custom_call.1} parent=47 // pred_fallthru
          _
        // Predicated region
        $region69: #{tpu_custom_call.1} parent=47 // pred_check
          %p408 = pneg %p179
        $region70: #{tpu_custom_call.1} parent=47 // pred_check_branch
          %410 = sbr.rel (%p408) target = $region72
        $region71: #{tpu_custom_call.1} parent=47 // pred_region
          %412 = dma.done [#allocation13], 512
        $region72: #{tpu_custom_call.1} parent=47 // pred_fallthru
          _
        // Predicated region
        $region73: #{tpu_custom_call.1} parent=47 // pred_check
          %p413 = pneg %p200
        $region74: #{tpu_custom_call.1} parent=47 // pred_check_branch
          %415 = sbr.rel (%p413) target = $region76
        $region75: #{tpu_custom_call.1} parent=47 // pred_region
          %417 = dma.done [#allocation13], 4096
        $region76: #{tpu_custom_call.1} parent=47 // pred_fallthru
          _
        %s418 = sand.u32 %s51, 1
        %s419 = scalar_lea.sflag [#allocation4], %s418
        %s420 = sand.u32 %s51, 1
        %s421 = smul.addr %s420, 8
        %s422 = scalar_lea.vmem [#allocation3], %s421
        %p423 = pneg %p64
        %p424 = pneg %p61
        %s425 = sand.u32 %s29, 1
        %s426 = scalar_lea.sflag [#allocation7], %s425
        %s427 = sand.u32 %s77, 1
        %s428 = smul.addr %s427, 8
        %s429 = scalar_lea.vmem [#allocation6], %s428
        %p430 = pneg %p90
        %p431 = pneg %p87
        %s432 = sand.u32 %s29, 1
        %s433 = scalar_lea.sflag [#allocation7], %s432
        %s434 = sand.u32 %s103, 1
        %s435 = smul.addr %s434, 8
        %s436 = scalar_lea.vmem [#allocation8], %s435
        %p437 = pneg %p116
        %p438 = pneg %p113
        %p439 = pneg %p137
        %p440 = pneg %p134
        %p441 = pneg %p158
        %p442 = pneg %p155
        %p443 = pneg %p179
        %p444 = pneg %p176
        %p445 = pneg %p200
        %p446 = pneg %p197
        %p447 = pneg %p228
        %p448 = pneg %p225
        %s449 = sand.u32 %s215, 1
        %s450 = scalar_lea.sflag [#allocation5], %s449
        %s451 = sand.u32 %s215, 1
        %s452 = smul.addr %s451, 8
        %s453 = scalar_lea.vmem [#allocation15], %s452
        %v454 = vld [vmem:[%s372] sm:$0xff]
        %v455 = vld [vmem:[%s382] sm:$0xff]
        %v456 = vld [vmem:[%s392] sm:$0xff]
        %v457 = vld [vmem:[#allocation9] sm:$0xff]
        %v458 = vld [vmem:[#allocation9 + $0x8] sm:$0xff]
        %v459 = vld [vmem:[#allocation9 + $0x10] sm:$0xff]
        %v460 = vld [vmem:[#allocation9 + $0x18] sm:$0xff]
        %vm461 = vcmask 130048
        %v463 = vsel %vm461, %v454, 0
        %465 = vmatpush.msra.mxu0 0.0
        %466 = vmatpush.msra.mxu0 0.0
        %467 = vmatpush.msra.mxu0 0.0
        %468 = vmatpush.msra.mxu0 0.0
        %469 = vmatpush.msra.mxu0 0.0
        %470 = vmatpush.msra.mxu0 0.0
        %471 = vmatpush.msra.mxu0 0.0
        %472 = vmatpush.msra.mxu0 0.0
        %473 = vmatpush.msra.mxu0 0.0
        %474 = vmatpush.msra.mxu0 0.0
        %475 = vmatpush.msra.mxu0 0.0
        %476 = vmatpush.msra.mxu0 0.0
        %477 = vmatpush.msra.mxu0 0.0
        %478 = vmatpush.msra.mxu0 0.0
        %479 = vmatpush.msra.mxu0 %v459
        %480 = vmatpush.msra.mxu0 %v457
        %481 = vmatmul.f32.gmra.mxu0 %v463
        %v482 = vpop.f32.mrf.mxu0
        %v483 = vadd.f32 0.0, %v482
        %484 = vdwg.mxu0
        %485 = vmatpush.msra.mxu0 0.0
        %486 = vmatpush.msra.mxu0 0.0
        %487 = vmatpush.msra.mxu0 0.0
        %488 = vmatpush.msra.mxu0 0.0
        %489 = vmatpush.msra.mxu0 0.0
        %490 = vmatpush.msra.mxu0 0.0
        %491 = vmatpush.msra.mxu0 0.0
        %492 = vmatpush.msra.mxu0 0.0
        %493 = vmatpush.msra.mxu0 0.0
        %494 = vmatpush.msra.mxu0 0.0
        %495 = vmatpush.msra.mxu0 0.0
        %496 = vmatpush.msra.mxu0 0.0
        %497 = vmatpush.msra.mxu0 0.0
        %498 = vmatpush.msra.mxu0 0.0
        %499 = vmatpush.msra.mxu0 %v460
        %500 = vmatpush.msra.mxu0 %v458
        %501 = vmatmul.f32.gmra.mxu0 %v463
        %v502 = vpop.f32.mrf.mxu0
        %v503 = vadd.f32 0.0, %v502
        %504 = vdwg.mxu0
        %v505 = vld [vmem:[#allocation11] sm:$0xff]
        %v506 = vld [vmem:[#allocation11 + $0x8] sm:$0xff]
        %v507 = vld [vmem:[#allocation11 + $0x10] sm:$0xff]
        %v508 = vld [vmem:[#allocation11 + $0x18] sm:$0xff]
        %v510 = vsel %vm461, %v455, 0
        %512 = vmatpush.msra.mxu0 0.0
        %513 = vmatpush.msra.mxu0 0.0
        %514 = vmatpush.msra.mxu0 0.0
        %515 = vmatpush.msra.mxu0 0.0
        %516 = vmatpush.msra.mxu0 0.0
        %517 = vmatpush.msra.mxu0 0.0
        %518 = vmatpush.msra.mxu0 0.0
        %519 = vmatpush.msra.mxu0 0.0
        %520 = vmatpush.msra.mxu0 0.0
        %521 = vmatpush.msra.mxu0 0.0
        %522 = vmatpush.msra.mxu0 0.0
        %523 = vmatpush.msra.mxu0 0.0
        %524 = vmatpush.msra.mxu0 0.0
        %525 = vmatpush.msra.mxu0 0.0
        %526 = vmatpush.msra.mxu0 %v507
        %527 = vmatpush.msra.mxu0 %v505
        %528 = vmatmul.f32.gmra.mxu0 %v510
        %v529 = vpop.f32.mrf.mxu0
        %v530 = vadd.f32 0.0, %v529
        %531 = vdwg.mxu0
        %532 = vmatpush.msra.mxu0 0.0
        %533 = vmatpush.msra.mxu0 0.0
        %534 = vmatpush.msra.mxu0 0.0
        %535 = vmatpush.msra.mxu0 0.0
        %536 = vmatpush.msra.mxu0 0.0
        %537 = vmatpush.msra.mxu0 0.0
        %538 = vmatpush.msra.mxu0 0.0
        %539 = vmatpush.msra.mxu0 0.0
        %540 = vmatpush.msra.mxu0 0.0
        %541 = vmatpush.msra.mxu0 0.0
        %542 = vmatpush.msra.mxu0 0.0
        %543 = vmatpush.msra.mxu0 0.0
        %544 = vmatpush.msra.mxu0 0.0
        %545 = vmatpush.msra.mxu0 0.0
        %546 = vmatpush.msra.mxu0 %v508
        %547 = vmatpush.msra.mxu0 %v506
        %548 = vmatmul.f32.gmra.mxu0 %v510
        %v549 = vpop.f32.mrf.mxu0
        %v550 = vadd.f32 0.0, %v549
        %551 = vdwg.mxu0
        %v552 = vld [vmem:[#allocation12] sm:$0xff]
        %v553 = vld [vmem:[#allocation12 + $0x8] sm:$0xff]
        %v554 = vld [vmem:[#allocation12 + $0x10] sm:$0xff]
        %v555 = vld [vmem:[#allocation12 + $0x18] sm:$0xff]
        %v557 = vsel %vm461, %v456, 0
        %559 = vmatpush.msra.mxu0 0.0
        %560 = vmatpush.msra.mxu0 0.0
        %561 = vmatpush.msra.mxu0 0.0
        %562 = vmatpush.msra.mxu0 0.0
        %563 = vmatpush.msra.mxu0 0.0
        %564 = vmatpush.msra.mxu0 0.0
        %565 = vmatpush.msra.mxu0 0.0
        %566 = vmatpush.msra.mxu0 0.0
        %567 = vmatpush.msra.mxu0 0.0
        %568 = vmatpush.msra.mxu0 0.0
        %569 = vmatpush.msra.mxu0 0.0
        %570 = vmatpush.msra.mxu0 0.0
        %571 = vmatpush.msra.mxu0 0.0
        %572 = vmatpush.msra.mxu0 0.0
        %573 = vmatpush.msra.mxu0 %v554
        %574 = vmatpush.msra.mxu0 %v552
        %575 = vmatmul.f32.gmra.mxu0 %v557
        %v576 = vpop.f32.mrf.mxu0
        %v577 = vadd.f32 0.0, %v576
        %578 = vdwg.mxu0
        %579 = vmatpush.msra.mxu0 0.0
        %580 = vmatpush.msra.mxu0 0.0
        %581 = vmatpush.msra.mxu0 0.0
        %582 = vmatpush.msra.mxu0 0.0
        %583 = vmatpush.msra.mxu0 0.0
        %584 = vmatpush.msra.mxu0 0.0
        %585 = vmatpush.msra.mxu0 0.0
        %586 = vmatpush.msra.mxu0 0.0
        %587 = vmatpush.msra.mxu0 0.0
        %588 = vmatpush.msra.mxu0 0.0
        %589 = vmatpush.msra.mxu0 0.0
        %590 = vmatpush.msra.mxu0 0.0
        %591 = vmatpush.msra.mxu0 0.0
        %592 = vmatpush.msra.mxu0 0.0
        %593 = vmatpush.msra.mxu0 %v555
        %594 = vmatpush.msra.mxu0 %v553
        %595 = vmatmul.f32.gmra.mxu0 %v557
        %v596 = vpop.f32.mrf.mxu0
        %v597 = vadd.f32 0.0, %v596
        %598 = vdwg.mxu0
        %599 = vmatpush.xpose.msra.mxu0 0.0
        %600 = vmatpush.xpose.msra.mxu0 0.0
        %601 = vmatpush.xpose.msra.mxu0 0.0
        %602 = vmatpush.xpose.msra.mxu0 0.0
        %603 = vmatpush.xpose.msra.mxu0 0.0
        %604 = vmatpush.xpose.msra.mxu0 0.0
        %605 = vmatpush.xpose.msra.mxu0 0.0
        %606 = vmatpush.xpose.msra.mxu0 0.0
        %607 = vmatpush.xpose.msra.mxu0 0.0
        %608 = vmatpush.xpose.msra.mxu0 0.0
        %609 = vmatpush.xpose.msra.mxu0 0.0
        %610 = vmatpush.xpose.msra.mxu0 0.0
        %611 = vmatpush.xpose.msra.mxu0 0.0
        %612 = vmatpush.xpose.msra.mxu0 0.0
        %613 = vmatpush.xpose.msra.mxu0 0.0
        %614 = vmatpush.xpose.msra.mxu0 %v530
        %615 = vmatmul.f32.gmra.mxu0 %v483
        %v616 = vpop.f32.mrf.mxu0
        %v617 = vadd.f32 0.0, %v616
        %618 = vdwg.mxu0
        %vm619 = vcmask 64512
        %v620 = vsel %vm619, %v617, -inf
        %621 = vmax.xlane.f32.xlu0 %v620
        %v622 = vpop.xlane.xlu0 %621
        %v623 = vsub.f32 %v617, %v622
        %v624 = vmul.f32 %v623, 1.442695
        %v625 = vpow.pop %v624
        %v626 = vsel %vm619, %v625, 0.0
        %627 = vadd.xlane.f32.xlu0 %v626
        %v628 = vpop.xlane.xlu0 %627
        %v629 = vrcp.pop %v628
        %v630 = vmul.f32 %v625, %v629
        %v632 = vsel %vm619, %v630, 0
        %634 = vmatpush.msra.mxu0 0.0
        %635 = vmatpush.msra.mxu0 0.0
        %636 = vmatpush.msra.mxu0 0.0
        %637 = vmatpush.msra.mxu0 0.0
        %638 = vmatpush.msra.mxu0 0.0
        %639 = vmatpush.msra.mxu0 0.0
        %640 = vmatpush.msra.mxu0 0.0
        %641 = vmatpush.msra.mxu0 0.0
        %642 = vmatpush.msra.mxu0 0.0
        %643 = vmatpush.msra.mxu0 0.0
        %644 = vmatpush.msra.mxu0 0.0
        %645 = vmatpush.msra.mxu0 0.0
        %646 = vmatpush.msra.mxu0 0.0
        %647 = vmatpush.msra.mxu0 0.0
        %648 = vmatpush.msra.mxu0 0.0
        %649 = vmatpush.msra.mxu0 %v577
        %650 = vmatmul.f32.gmra.mxu0 %v632
        %v651 = vpop.f32.mrf.mxu0
        %v652 = vadd.f32 0.0, %v651
        %653 = vdwg.mxu0
        %654 = vst [vmem:[#allocation2] sm:$0xff] %v652
        %655 = vmatpush.xpose.msra.mxu0 0.0
        %656 = vmatpush.xpose.msra.mxu0 0.0
        %657 = vmatpush.xpose.msra.mxu0 0.0
        %658 = vmatpush.xpose.msra.mxu0 0.0
        %659 = vmatpush.xpose.msra.mxu0 0.0
        %660 = vmatpush.xpose.msra.mxu0 0.0
        %661 = vmatpush.xpose.msra.mxu0 0.0
        %662 = vmatpush.xpose.msra.mxu0 0.0
        %663 = vmatpush.xpose.msra.mxu0 0.0
        %664 = vmatpush.xpose.msra.mxu0 0.0
        %665 = vmatpush.xpose.msra.mxu0 0.0
        %666 = vmatpush.xpose.msra.mxu0 0.0
        %667 = vmatpush.xpose.msra.mxu0 0.0
        %668 = vmatpush.xpose.msra.mxu0 0.0
        %669 = vmatpush.xpose.msra.mxu0 0.0
        %670 = vmatpush.xpose.msra.mxu0 %v550
        %671 = vmatmul.f32.gmra.mxu0 %v503
        %v672 = vpop.f32.mrf.mxu0
        %v673 = vadd.f32 0.0, %v672
        %674 = vdwg.mxu0
        %v675 = vsel %vm619, %v673, -inf
        %676 = vmax.xlane.f32.xlu0 %v675
        %v677 = vpop.xlane.xlu0 %676
        %v678 = vsub.f32 %v673, %v677
        %v679 = vmul.f32 %v678, 1.442695
        %v680 = vpow.pop %v679
        %v681 = vsel %vm619, %v680, 0.0
        %682 = vadd.xlane.f32.xlu0 %v681
        %v683 = vpop.xlane.xlu0 %682
        %v684 = vrcp.pop %v683
        %v685 = vmul.f32 %v680, %v684
        %v687 = vsel %vm619, %v685, 0
        %689 = vmatpush.msra.mxu0 0.0
        %690 = vmatpush.msra.mxu0 0.0
        %691 = vmatpush.msra.mxu0 0.0
        %692 = vmatpush.msra.mxu0 0.0
        %693 = vmatpush.msra.mxu0 0.0
        %694 = vmatpush.msra.mxu0 0.0
        %695 = vmatpush.msra.mxu0 0.0
        %696 = vmatpush.msra.mxu0 0.0
        %697 = vmatpush.msra.mxu0 0.0
        %698 = vmatpush.msra.mxu0 0.0
        %699 = vmatpush.msra.mxu0 0.0
        %700 = vmatpush.msra.mxu0 0.0
        %701 = vmatpush.msra.mxu0 0.0
        %702 = vmatpush.msra.mxu0 0.0
        %703 = vmatpush.msra.mxu0 0.0
        %704 = vmatpush.msra.mxu0 %v597
        %705 = vmatmul.f32.gmra.mxu0 %v687
        %v706 = vpop.f32.mrf.mxu0
        %v707 = vadd.f32 0.0, %v706
        %708 = vdwg.mxu0
        %709 = vst [vmem:[#allocation2 + $0x8] sm:$0xff] %v707
        %v710 = vld [vmem:[#allocation2] sm:$0xff]
        %v711 = vld [vmem:[#allocation2 + $0x8] sm:$0xff]
        %v712 = vld [vmem:[#allocation14] sm:$0xff]
        %v713 = vld [vmem:[#allocation14 + $0x8] sm:$0xff]
        %v714 = vld [vmem:[#allocation14 + $0x10] sm:$0xff]
        %v715 = vld [vmem:[#allocation14 + $0x18] sm:$0xff]
        %v716 = vld [vmem:[#allocation14 + $0x20] sm:$0xff]
        %v717 = vld [vmem:[#allocation14 + $0x28] sm:$0xff]
        %v718 = vld [vmem:[#allocation14 + $0x30] sm:$0xff]
        %v719 = vld [vmem:[#allocation14 + $0x38] sm:$0xff]
        %v720 = vld [vmem:[#allocation14 + $0x40] sm:$0xff]
        %v721 = vld [vmem:[#allocation14 + $0x48] sm:$0xff]
        %v722 = vld [vmem:[#allocation14 + $0x50] sm:$0xff]
        %v723 = vld [vmem:[#allocation14 + $0x58] sm:$0xff]
        %v724 = vld [vmem:[#allocation14 + $0x60] sm:$0xff]
        %v725 = vld [vmem:[#allocation14 + $0x68] sm:$0xff]
        %v726 = vld [vmem:[#allocation14 + $0x70] sm:$0xff]
        %v727 = vld [vmem:[#allocation14 + $0x78] sm:$0xff]
        %v728 = vld [vmem:[#allocation14 + $0x80] sm:$0xff]
        %v729 = vld [vmem:[#allocation14 + $0x88] sm:$0xff]
        %v730 = vld [vmem:[#allocation14 + $0x90] sm:$0xff]
        %v731 = vld [vmem:[#allocation14 + $0x98] sm:$0xff]
        %v732 = vld [vmem:[#allocation14 + $0xa0] sm:$0xff]
        %v733 = vld [vmem:[#allocation14 + $0xa8] sm:$0xff]
        %v734 = vld [vmem:[#allocation14 + $0xb0] sm:$0xff]
        %v735 = vld [vmem:[#allocation14 + $0xb8] sm:$0xff]
        %v736 = vld [vmem:[#allocation14 + $0xc0] sm:$0xff]
        %v737 = vld [vmem:[#allocation14 + $0xc8] sm:$0xff]
        %v738 = vld [vmem:[#allocation14 + $0xd0] sm:$0xff]
        %v739 = vld [vmem:[#allocation14 + $0xd8] sm:$0xff]
        %v740 = vld [vmem:[#allocation14 + $0xe0] sm:$0xff]
        %v741 = vld [vmem:[#allocation14 + $0xe8] sm:$0xff]
        %v742 = vld [vmem:[#allocation14 + $0xf0] sm:$0xff]
        %v743 = vld [vmem:[#allocation14 + $0xf8] sm:$0xff]
        %744 = vmatpush.msra.mxu0 %v727
        %745 = vmatpush.msra.mxu0 %v726
        %746 = vmatpush.msra.mxu0 %v725
        %747 = vmatpush.msra.mxu0 %v724
        %748 = vmatpush.msra.mxu0 %v723
        %749 = vmatpush.msra.mxu0 %v722
        %750 = vmatpush.msra.mxu0 %v721
        %751 = vmatpush.msra.mxu0 %v720
        %752 = vmatpush.msra.mxu0 %v719
        %753 = vmatpush.msra.mxu0 %v718
        %754 = vmatpush.msra.mxu0 %v717
        %755 = vmatpush.msra.mxu0 %v716
        %756 = vmatpush.msra.mxu0 %v715
        %757 = vmatpush.msra.mxu0 %v714
        %758 = vmatpush.msra.mxu0 %v713
        %759 = vmatpush.msra.mxu0 %v712
        %760 = vmatmul.f32.gmra.mxu0 %v710
        %v761 = vpop.f32.mrf.mxu0
        %v762 = vadd.f32 0.0, %v761
        %763 = vdwg.mxu0
        %764 = vmatpush.msra.mxu0 %v743
        %765 = vmatpush.msra.mxu0 %v742
        %766 = vmatpush.msra.mxu0 %v741
        %767 = vmatpush.msra.mxu0 %v740
        %768 = vmatpush.msra.mxu0 %v739
        %769 = vmatpush.msra.mxu0 %v738
        %770 = vmatpush.msra.mxu0 %v737
        %771 = vmatpush.msra.mxu0 %v736
        %772 = vmatpush.msra.mxu0 %v735
        %773 = vmatpush.msra.mxu0 %v734
        %774 = vmatpush.msra.mxu0 %v733
        %775 = vmatpush.msra.mxu0 %v732
        %776 = vmatpush.msra.mxu0 %v731
        %777 = vmatpush.msra.mxu0 %v730
        %778 = vmatpush.msra.mxu0 %v729
        %779 = vmatpush.msra.mxu0 %v728
        %780 = vmatmul.f32.gmra.mxu0 %v711
        %v781 = vpop.f32.mrf.mxu0
        %v782 = vadd.f32 %v762, %v781
        %783 = vdwg.mxu0
        %784 = vst [vmem:[%s453] sm:$0xff] %v782
        %s785 = sand.u32 %s215, 1
        %s786 = scalar_lea.sflag [#allocation5], %s785
        %s787 = sand.u32 %s215, 1
        %s788 = smul.addr %s787, 8
        %s789 = scalar_lea.vmem [#allocation15], %s788
        // Predicated region
        $region77: #{tpu_custom_call.1} parent=47 // pred_check
          %p790 = pneg %p225
        $region78: #{tpu_custom_call.1} parent=47 // pred_check_branch
          %792 = sbr.rel (%p790) target = $region80
        $region79: #{tpu_custom_call.1} parent=47 // pred_region
          %794 = vsyncadd %s786, 0
          %s795 = sadd.s32 %s34, %s33
          %s796 = smul.addr %s795, 8
          %s797 = scalar_lea.hbm %s7, %s796
          %s799 = sshll.u32 %s789, 4
          %s800 = int_to_ptr.vmem [resolvable:$true] %s799
          %s801 = sshll.u32 %s797, 4
          %s802 = int_to_ptr.hbm [resolvable:$true] %s801
          %804 = dma.vmem_to_hbm [thread:$0]  %s800, 128, %s802, %s786
        $region80: #{tpu_custom_call.1} parent=47 // pred_fallthru
          _
      $region48: #{tpu_custom_call.1} parent=5 // pred_fallthru
        _
      %p805 = scmp.le.s32.totalorder 2, %s24
      // Predicated region
      $region81: #{tpu_custom_call.1} parent=5 // pred_check
        %p806 = pneg %p805
      $region82: #{tpu_custom_call.1} parent=5 // pred_check_branch
        %808 = sbr.rel (%p806) target = $region84
      $region83: #{tpu_custom_call.1} parent=5 // pred_region
        %s809 = ssub.s32 %s24, 2
        // Predicated region
        $region85: #{tpu_custom_call.1} parent=83 // pred_check
          %p810 = pneg %p231
        $region86: #{tpu_custom_call.1} parent=83 // pred_check_branch
          %812 = sbr.rel (%p810) target = $region88
        $region87: #{tpu_custom_call.1} parent=83 // pred_region
          %s813 = sand.u32 %s216, 1
          %s814 = scalar_lea.sflag [#allocation5], %s813
          %s815 = sand.u32 %s216, 1
          %s816 = smul.addr %s815, 8
          %s817 = scalar_lea.vmem [#allocation15], %s816
          %819 = dma.done %s814, 128
        $region88: #{tpu_custom_call.1} parent=83 // pred_fallthru
          _
      $region84: #{tpu_custom_call.1} parent=5 // pred_fallthru
        _
    $region6: #{tpu_custom_call.1} parent=1 // loop_footer
      %s28 = sadd.s32 1, %s24
    $region7: #{tpu_custom_call.1} parent=1 // loop_footer_branch
      %23 = sbr.rel target = $region3
    $region8: #{tpu_custom_call.1} parent=1 // loop_exit
      _
    %820 = vsyncpa [#allocation4], 1
    %s821 = scalar_lea.sflag [#allocation4], 1
    %822 = vsyncpa %s821, 1
    %823 = vsyncpa [#allocation7], 1
    %s824 = scalar_lea.sflag [#allocation7], 1
    %825 = vsyncpa %s824, 1
    %826 = vsyncpa [#allocation10], 1
    %827 = vsyncpa [#allocation13], 1
    %828 = vsyncpa [#allocation5], 1
    %s829 = scalar_lea.sflag [#allocation5], 1
    %830 = vsyncpa %s829, 1

// kernel: tpu_custom_call.1
$region0: #{tpu_custom_call.1}
  #allocation0 [shape = 'u32[]', space=smem, size = 0x4, offset = 0x4, fixed_abs, tag = 'smem constant byte address 0x4 - core index']
  #allocation1 [shape = 'u32[72,128]{1,0:T(1,128)}', space=vmem, size = 0x9000, scoped, tag = 'internal scratch']
  #allocation2 [shape = 'f32[1,8,256]{2,1,0:T(8,128)}', space=vmem, size = 0x2000, scoped, tag = 'scratch operand']
  %s0 = inlined_call_operand.hbm [shape: f32[2,8,16], index: 0, kind: input, shape index: {}]
  %s1 = inlined_call_operand.hbm [shape: f32[2,8,16], index: 1, kind: input, shape index: {}]
  %s2 = inlined_call_operand.hbm [shape: f32[2,8,16], index: 2, kind: input, shape index: {}]
  %s3 = inlined_call_operand.hbm [shape: f32[16,256], index: 3, kind: input, shape index: {}]
  %s4 = inlined_call_operand.hbm [shape: f32[16,256], index: 4, kind: input, shape index: {}]
  %s5 = inlined_call_operand.hbm [shape: f32[16,256], index: 5, kind: input, shape index: {}]
  %s6 = inlined_call_operand.hbm [shape: f32[256,128], index: 6, kind: input, shape index: {}]
  %s7 = inlined_call_operand.hbm [shape: f32[2,8,128], index: 7, kind: output, shape index: {}]
  %s8 = sld [smem:[#allocation0]]
  $region89: #{tpu_custom_call.1} parent=0
    _
  %s10 = ssub.s32 1, %s8
  %s11 = scalar_select 0, %s10, %s8
  $region1: #{tpu_custom_call.1} parent=0
    #allocation3 [shape = 'u8[8192]{0}', space=vmem, size = 0x2000, scoped, tag = 'input window, operand 0']
    #allocation4 [shape = 's32[2]{0}', space=sflag, size = 0x8, scoped, tag = 'scoped memory for tpu_custom_call.1']
    #allocation5 [shape = 's32[2]{0}', space=sflag, size = 0x8, scoped, tag = 'scoped memory for tpu_custom_call.1']
    #allocation6 [shape = 'u8[8192]{0}', space=vmem, size = 0x2000, scoped, tag = 'input window, operand 1']
    #allocation7 [shape = 's32[2]{0}', space=sflag, size = 0x8, scoped, tag = 'scoped memory for tpu_custom_call.1']
    #allocation8 [shape = 'u8[8192]{0}', space=vmem, size = 0x2000, scoped, tag = 'input window, operand 2']
    #allocation9 [shape = 'u8[16384]{0}', space=vmem, size = 0x4000, scoped, tag = 'input window, operand 3, single buffered']
    #allocation10 [shape = 's32[1]{0}', space=sflag, size = 0x4, scoped, tag = 'scoped memory for tpu_custom_call.1']
    #allocation11 [shape = 'u8[16384]{0}', space=vmem, size = 0x4000, scoped, tag = 'input window, operand 4, single buffered']
    #allocation12 [shape = 'u8[16384]{0}', space=vmem, size = 0x4000, scoped, tag = 'input window, operand 5, single buffered']
    #allocation13 [shape = 's32[1]{0}', space=sflag, size = 0x4, scoped, tag = 'scoped memory for tpu_custom_call.1']
    #allocation14 [shape = 'u8[131072]{0}', space=vmem, size = 0x20000, scoped, tag = 'input window, operand 6, single buffered']
    #allocation15 [shape = 'u8[8192]{0}', space=vmem, size = 0x2000, scoped, tag = 'output window, operand 0']
    %12 = vsyncpa [#allocation4], 0
    %s13 = scalar_lea.sflag [#allocation4], 1
    %14 = vsyncpa %s13, 0
    %15 = vsyncpa [#allocation7], 0
    %s16 = scalar_lea.sflag [#allocation7], 1
    %17 = vsyncpa %s16, 0
    %18 = vsyncpa [#allocation10], 0
    %19 = vsyncpa [#allocation13], 0
    %20 = vsyncpa [#allocation5], 0
    %s21 = scalar_lea.sflag [#allocation5], 1
    %22 = vsyncpa %s21, 0
    loop: start=0, step=1, limit=4
    $region2: #{tpu_custom_call.1} parent=1 // loop_pre_header
      _
    $region3: #{tpu_custom_call.1} parent=1 // loop_header
      %s24 = sphi 0, %s28
      %p25 = scmp.ge.s32.totalorder %s24, 4
      %s31 = sphi 0, %s43
      %s32 = sphi 0, %s39
      %s33 = sphi 0, %s31
      %s34 = sphi 0, %s32
      %s35 = sphi 0, %s33
      %s36 = sphi 0, %s34
      %s48 = sphi 0, %s50
      %s51 = sphi 0, %s48
      %s52 = sphi 0, %s51
      %s68 = sphi 0, %s52
      %s74 = sphi 0, %s76
      %s77 = sphi 0, %s74
      %s78 = sphi 0, %s77
      %s94 = sphi 0, %s78
      %s100 = sphi 0, %s102
      %s103 = sphi 0, %s100
      %s104 = sphi 0, %s103
      %s120 = sphi 0, %s104
      %s124 = sphi 0, %s124
      %s126 = sphi 0, %s124
      %s127 = sphi 0, %s126
      %s141 = sphi 0, %s127
      %s145 = sphi 0, %s145
      %s147 = sphi 0, %s145
      %s148 = sphi 0, %s147
      %s162 = sphi 0, %s148
      %s166 = sphi 0, %s166
      %s168 = sphi 0, %s166
      %s169 = sphi 0, %s168
      %s183 = sphi 0, %s169
      %s187 = sphi 0, %s187
      %s189 = sphi 0, %s187
      %s190 = sphi 0, %s189
      %s204 = sphi 0, %s190
      %s212 = sphi 0, %s214
      %s215 = sphi 0, %s212
      %s216 = sphi 0, %s215
      %s232 = sphi 0, %s216
    $region4: #{tpu_custom_call.1} parent=1 // loop_header_branch
      %27 = sbr.rel (%p25) target = $region8
    $region5: #{tpu_custom_call.1} parent=1 // loop_body
      %s29 = ssub.s32 %s24, 1
      %s30 = ssub.s32 %s24, 2
      %s37 = sadd.s32 1, %s32
      %p38 = scmp.ge.s32.totalorder %s37, 1
      %s39 = scalar_select %p38, 0, %s37
      %s40 = sadd.s32 1, %s31
      %s41 = scalar_select %p38, %s40, %s31
      %p42 = scmp.ge.s32.totalorder %s41, 2
      %s43 = scalar_select %p42, 0, %s41
      %s44 = ssub.s32 %s31, %s43
      %s45 = ssub.s32 %s32, %s39
      %s46 = sor.u32 %s44, %s45
      %p47 = scmp.eq.s32.totalorder %s46, 0
      %s49 = sadd.s32 %s48, 1
      %s50 = scalar_select %p47, %s48, %s49
      %p53 = pneg %p47
      %p54 = scmp.eq.s32.totalorder %s24, 1
      %p55 = por %p53, %p54
      %p56 = scmp.ne.s32.totalorder %s48, %s51
      %p57 = scmp.eq.s32.totalorder %s24, 0
      %p58 = por %p56, %p57
      %p59 = scmp.ne.s32.totalorder %s48, %s51
      %p60 = scmp.eq.s32.totalorder %s29, 1
      %p61 = por %p59, %p60
      %p62 = scmp.ne.s32.totalorder %s51, %s52
      %p63 = scmp.eq.s32.totalorder %s29, 0
      %p64 = por %p62, %p63
      %p65 = scmp.ne.s32.totalorder %s51, %s52
      %p66 = scmp.eq.s32.totalorder %s30, 1
      %p67 = por %p65, %p66
      %p69 = scmp.ne.s32.totalorder %s52, %s68
      %p70 = scmp.eq.s32.totalorder %s30, 0
      %p71 = por %p69, %p70
      %s72 = ssub.s32 %s31, %s43
      %p73 = scmp.eq.s32.totalorder %s72, 0
      %s75 = sadd.s32 %s74, 1
      %s76 = scalar_select %p73, %s74, %s75
      %p79 = pneg %p73
      %p80 = scmp.eq.s32.totalorder %s24, 1
      %p81 = por %p79, %p80
      %p82 = scmp.ne.s32.totalorder %s74, %s77
      %p83 = scmp.eq.s32.totalorder %s24, 0
      %p84 = por %p82, %p83
      %p85 = scmp.ne.s32.totalorder %s74, %s77
      %p86 = scmp.eq.s32.totalorder %s29, 1
      %p87 = por %p85, %p86
      %p88 = scmp.ne.s32.totalorder %s77, %s78
      %p89 = scmp.eq.s32.totalorder %s29, 0
      %p90 = por %p88, %p89
      %p91 = scmp.ne.s32.totalorder %s77, %s78
      %p92 = scmp.eq.s32.totalorder %s30, 1
      %p93 = por %p91, %p92
      %p95 = scmp.ne.s32.totalorder %s78, %s94
      %p96 = scmp.eq.s32.totalorder %s30, 0
      %p97 = por %p95, %p96
      %s98 = ssub.s32 %s31, %s43
      %p99 = scmp.eq.s32.totalorder %s98, 0
      %s101 = sadd.s32 %s100, 1
      %s102 = scalar_select %p99, %s100, %s101
      %p105 = pneg %p99
      %p106 = scmp.eq.s32.totalorder %s24, 1
      %p107 = por %p105, %p106
      %p108 = scmp.ne.s32.totalorder %s100, %s103
      %p109 = scmp.eq.s32.totalorder %s24, 0
      %p110 = por %p108, %p109
      %p111 = scmp.ne.s32.totalorder %s100, %s103
      %p112 = scmp.eq.s32.totalorder %s29, 1
      %p113 = por %p111, %p112
      %p114 = scmp.ne.s32.totalorder %s103, %s104
      %p115 = scmp.eq.s32.totalorder %s29, 0
      %p116 = por %p114, %p115
      %p117 = scmp.ne.s32.totalorder %s103, %s104
      %p118 = scmp.eq.s32.totalorder %s30, 1
      %p119 = por %p117, %p118
      %p121 = scmp.ne.s32.totalorder %s104, %s120
      %p122 = scmp.eq.s32.totalorder %s30, 0
      %p123 = por %p121, %p122
      %s125 = sadd.s32 %s124, 1
      %p128 = scmp.eq.s32.totalorder %s24, 1
      %p129 = scmp.ne.s32.totalorder %s124, %s126
      %p130 = scmp.eq.s32.totalorder %s24, 0
      %p131 = por %p129, %p130
      %p132 = scmp.ne.s32.totalorder %s124, %s126
      %p133 = scmp.eq.s32.totalorder %s29, 1
      %p134 = por %p132, %p133
      %p135 = scmp.ne.s32.totalorder %s126, %s127
      %p136 = scmp.eq.s32.totalorder %s29, 0
      %p137 = por %p135, %p136
      %p138 = scmp.ne.s32.totalorder %s126, %s127
      %p139 = scmp.eq.s32.totalorder %s30, 1
      %p140 = por %p138, %p139
      %p142 = scmp.ne.s32.totalorder %s127, %s141
      %p143 = scmp.eq.s32.totalorder %s30, 0
      %p144 = por %p142, %p143
      %s146 = sadd.s32 %s145, 1
      %p149 = scmp.eq.s32.totalorder %s24, 1
      %p150 = scmp.ne.s32.totalorder %s145, %s147
      %p151 = scmp.eq.s32.totalorder %s24, 0
      %p152 = por %p150, %p151
      %p153 = scmp.ne.s32.totalorder %s145, %s147
      %p154 = scmp.eq.s32.totalorder %s29, 1
      %p155 = por %p153, %p154
      %p156 = scmp.ne.s32.totalorder %s147, %s148
      %p157 = scmp.eq.s32.totalorder %s29, 0
      %p158 = por %p156, %p157
      %p159 = scmp.ne.s32.totalorder %s147, %s148
      %p160 = scmp.eq.s32.totalorder %s30, 1
      %p161 = por %p159, %p160
      %p163 = scmp.ne.s32.totalorder %s148, %s162
      %p164 = scmp.eq.s32.totalorder %s30, 0
      %p165 = por %p163, %p164
      %s167 = sadd.s32 %s166, 1
      %p170 = scmp.eq.s32.totalorder %s24, 1
      %p171 = scmp.ne.s32.totalorder %s166, %s168
      %p172 = scmp.eq.s32.totalorder %s24, 0
      %p173 = por %p171, %p172
      %p174 = scmp.ne.s32.totalorder %s166, %s168
      %p175 = scmp.eq.s32.totalorder %s29, 1
      %p176 = por %p174, %p175
      %p177 = scmp.ne.s32.totalorder %s168, %s169
      %p178 = scmp.eq.s32.totalorder %s29, 0
      %p179 = por %p177, %p178
      %p180 = scmp.ne.s32.totalorder %s168, %s169
      %p181 = scmp.eq.s32.totalorder %s30, 1
      %p182 = por %p180, %p181
      %p184 = scmp.ne.s32.totalorder %s169, %s183
      %p185 = scmp.eq.s32.totalorder %s30, 0
      %p186 = por %p184, %p185
      %s188 = sadd.s32 %s187, 1
      %p191 = scmp.eq.s32.totalorder %s24, 1
      %p192 = scmp.ne.s32.totalorder %s187, %s189
      %p193 = scmp.eq.s32.totalorder %s24, 0
      %p194 = por %p192, %p193
      %p195 = scmp.ne.s32.totalorder %s187, %s189
      %p196 = scmp.eq.s32.totalorder %s29, 1
      %p197 = por %p195, %p196
      %p198 = scmp.ne.s32.totalorder %s189, %s190
      %p199 = scmp.eq.s32.totalorder %s29, 0
      %p200 = por %p198, %p199
      %p201 = scmp.ne.s32.totalorder %s189, %s190
      %p202 = scmp.eq.s32.totalorder %s30, 1
      %p203 = por %p201, %p202
      %p205 = scmp.ne.s32.totalorder %s190, %s204
      %p206 = scmp.eq.s32.totalorder %s30, 0
      %p207 = por %p205, %p206
      %s208 = ssub.s32 %s31, %s43
      %s209 = ssub.s32 %s32, %s39
      %s210 = sor.u32 %s208, %s209
      %p211 = scmp.eq.s32.totalorder %s210, 0
      %s213 = sadd.s32 %s212, 1
      %s214 = scalar_select %p211, %s212, %s213
      %p217 = pneg %p211
      %p218 = scmp.eq.s32.totalorder %s24, 1
      %p219 = por %p217, %p218
      %p220 = scmp.ne.s32.totalorder %s212, %s215
      %p221 = scmp.eq.s32.totalorder %s24, 0
      %p222 = por %p220, %p221
      %p223 = scmp.ne.s32.totalorder %s212, %s215
      %p224 = scmp.eq.s32.totalorder %s29, 1
      %p225 = por %p223, %p224
      %p226 = scmp.ne.s32.totalorder %s215, %s216
      %p227 = scmp.eq.s32.totalorder %s29, 0
      %p228 = por %p226, %p227
      %p229 = scmp.ne.s32.totalorder %s215, %s216
      %p230 = scmp.eq.s32.totalorder %s30, 1
      %p231 = por %p229, %p230
      %p233 = scmp.ne.s32.totalorder %s216, %s232
      %p234 = scmp.eq.s32.totalorder %s30, 0
      %p235 = por %p233, %p234
      %p236 = scmp.le.s32.totalorder 1, %s24
      %p237 = scmp.lt.s32.totalorder %s24, 3
      %p238 = pnand %p236, %p237
      %p239 = pneg %p238
      // Predicated region
      $region9: #{tpu_custom_call.1} parent=5 // pred_check
        _
      $region10: #{tpu_custom_call.1} parent=5 // pred_check_branch
        %241 = sbr.rel (%p238) target = $region12
      $region11: #{tpu_custom_call.1} parent=5 // pred_region
        %s242 = ssub.s32 %s24, 1
        // Predicated region
        $region13: #{tpu_custom_call.1} parent=11 // pred_check
          %p243 = pneg %p137
        $region14: #{tpu_custom_call.1} parent=11 // pred_check_branch
          %245 = sbr.rel (%p243) target = $region16
        $region15: #{tpu_custom_call.1} parent=11 // pred_region
          %247 = vsyncadd [#allocation10], 0
          %s248 = sshll.u32 %s3, 4
          %s249 = int_to_ptr.hbm [resolvable:$true] %s248
          %s250 = sshll.u32 [#allocation9], 4
          %s251 = int_to_ptr.vmem [resolvable:$true] %s250
          %256 = dma.hbm_to_vmem [thread:$0]  %s249, 512, %s251, [#allocation10], 256, 256, 16
        $region16: #{tpu_custom_call.1} parent=11 // pred_fallthru
          _
        // Predicated region
        $region17: #{tpu_custom_call.1} parent=11 // pred_check
          %p257 = pneg %p158
        $region18: #{tpu_custom_call.1} parent=11 // pred_check_branch
          %259 = sbr.rel (%p257) target = $region20
        $region19: #{tpu_custom_call.1} parent=11 // pred_region
          %261 = vsyncadd [#allocation10], 0
          %s262 = sshll.u32 %s4, 4
          %s263 = int_to_ptr.hbm [resolvable:$true] %s262
          %s264 = sshll.u32 [#allocation11], 4
          %s265 = int_to_ptr.vmem [resolvable:$true] %s264
          %270 = dma.hbm_to_vmem [thread:$0]  %s263, 512, %s265, [#allocation10], 256, 256, 16
        $region20: #{tpu_custom_call.1} parent=11 // pred_fallthru
          _
        // Predicated region
        $region21: #{tpu_custom_call.1} parent=11 // pred_check
          %p271 = pneg %p179
        $region22: #{tpu_custom_call.1} parent=11 // pred_check_branch
          %273 = sbr.rel (%p271) target = $region24
        $region23: #{tpu_custom_call.1} parent=11 // pred_region
          %275 = vsyncadd [#allocation13], 0
          %s276 = sshll.u32 %s5, 4
          %s277 = int_to_ptr.hbm [resolvable:$true] %s276
          %s278 = sshll.u32 [#allocation12], 4
          %s279 = int_to_ptr.vmem [resolvable:$true] %s278
          %284 = dma.hbm_to_vmem [thread:$0]  %s277, 512, %s279, [#allocation13], 256, 256, 16
        $region24: #{tpu_custom_call.1} parent=11 // pred_fallthru
          _
        // Predicated region
        $region25: #{tpu_custom_call.1} parent=11 // pred_check
          %p285 = pneg %p200
        $region26: #{tpu_custom_call.1} parent=11 // pred_check_branch
          %287 = sbr.rel (%p285) target = $region28
        $region27: #{tpu_custom_call.1} parent=11 // pred_region
          %289 = vsyncadd [#allocation13], 0
          %s290 = sshll.u32 %s6, 4
          %s291 = int_to_ptr.hbm [resolvable:$true] %s290
          %s292 = sshll.u32 [#allocation14], 4
          %s293 = int_to_ptr.vmem [resolvable:$true] %s292
          %298 = dma.hbm_to_vmem [thread:$0]  %s291, 4096, %s293, [#allocation13], 128, 128, 8
        $region28: #{tpu_custom_call.1} parent=11 // pred_fallthru
          _
      $region12: #{tpu_custom_call.1} parent=5 // pred_fallthru
        _
      %p299 = scmp.lt.s32.totalorder %s24, 2
      // Predicated region
      $region29: #{tpu_custom_call.1} parent=5 // pred_check
        %p300 = pneg %p299
      $region30: #{tpu_custom_call.1} parent=5 // pred_check_branch
        %302 = sbr.rel (%p300) target = $region32
      $region31: #{tpu_custom_call.1} parent=5 // pred_region
        // Predicated region
        $region33: #{tpu_custom_call.1} parent=31 // pred_check
          %p303 = pneg %p58
        $region34: #{tpu_custom_call.1} parent=31 // pred_check_branch
          %305 = sbr.rel (%p303) target = $region36
        $region35: #{tpu_custom_call.1} parent=31 // pred_region
          %s306 = sand.u32 %s48, 1
          %s307 = scalar_lea.sflag [#allocation4], %s306
          %s308 = sand.u32 %s48, 1
          %s309 = smul.addr %s308, 8
          %s310 = scalar_lea.vmem [#allocation3], %s309
          %312 = vsyncadd %s307, 0
          %s313 = sadd.s32 %s32, %s31
          %s314 = smul.addr %s313, 8
          %s315 = scalar_lea.hbm %s0, %s314
          %s317 = sshll.u32 %s315, 4
          %s318 = int_to_ptr.hbm [resolvable:$true] %s317
          %s319 = sshll.u32 %s310, 4
          %s320 = int_to_ptr.vmem [resolvable:$true] %s319
          %322 = dma.hbm_to_vmem [thread:$0]  %s318, 128, %s320, %s307
        $region36: #{tpu_custom_call.1} parent=31 // pred_fallthru
          _
        // Predicated region
        $region37: #{tpu_custom_call.1} parent=31 // pred_check
          %p323 = pneg %p84
        $region38: #{tpu_custom_call.1} parent=31 // pred_check_branch
          %325 = sbr.rel (%p323) target = $region40
        $region39: #{tpu_custom_call.1} parent=31 // pred_region
          %s326 = sand.u32 %s24, 1
          %s327 = scalar_lea.sflag [#allocation7], %s326
          %s328 = sand.u32 %s74, 1
          %s329 = smul.addr %s328, 8
          %s330 = scalar_lea.vmem [#allocation6], %s329
          %332 = vsyncadd %s327, 0
          %s333 = smul.addr %s31, 8
          %s334 = scalar_lea.hbm %s1, %s333
          %s336 = sshll.u32 %s334, 4
          %s337 = int_to_ptr.hbm [resolvable:$true] %s336
          %s338 = sshll.u32 %s330, 4
          %s339 = int_to_ptr.vmem [resolvable:$true] %s338
          %341 = dma.hbm_to_vmem [thread:$0]  %s337, 128, %s339, %s327
        $region40: #{tpu_custom_call.1} parent=31 // pred_fallthru
          _
        // Predicated region
        $region41: #{tpu_custom_call.1} parent=31 // pred_check
          %p342 = pneg %p110
        $region42: #{tpu_custom_call.1} parent=31 // pred_check_branch
          %344 = sbr.rel (%p342) target = $region44
        $region43: #{tpu_custom_call.1} parent=31 // pred_region
          %s345 = sand.u32 %s24, 1
          %s346 = scalar_lea.sflag [#allocation7], %s345
          %s347 = sand.u32 %s100, 1
          %s348 = smul.addr %s347, 8
          %s349 = scalar_lea.vmem [#allocation8], %s348
          %351 = vsyncadd %s346, 0
          %s352 = smul.addr %s31, 8
          %s353 = scalar_lea.hbm %s2, %s352
          %s355 = sshll.u32 %s353, 4
          %s356 = int_to_ptr.hbm [resolvable:$true] %s355
          %s357 = sshll.u32 %s349, 4
          %s358 = int_to_ptr.vmem [resolvable:$true] %s357
          %360 = dma.hbm_to_vmem [thread:$0]  %s356, 128, %s358, %s346
        $region44: #{tpu_custom_call.1} parent=31 // pred_fallthru
          _
      $region32: #{tpu_custom_call.1} parent=5 // pred_fallthru
        _
      %p361 = scmp.le.s32.totalorder 1, %s24
      %p362 = scmp.lt.s32.totalorder %s24, 3
      %p363 = pnand %p361, %p362
      %p364 = pneg %p363
      // Predicated region
      $region45: #{tpu_custom_call.1} parent=5 // pred_check
        _
      $region46: #{tpu_custom_call.1} parent=5 // pred_check_branch
        %366 = sbr.rel (%p363) target = $region48
      $region47: #{tpu_custom_call.1} parent=5 // pred_region
        %s367 = ssub.s32 %s24, 1
        %s368 = sand.u32 %s51, 1
        %s369 = scalar_lea.sflag [#allocation4], %s368
        %s370 = sand.u32 %s51, 1
        %s371 = smul.addr %s370, 8
        %s372 = scalar_lea.vmem [#allocation3], %s371
        // Predicated region
        $region49: #{tpu_custom_call.1} parent=47 // pred_check
          %p373 = pneg %p64
        $region50: #{tpu_custom_call.1} parent=47 // pred_check_branch
          %375 = sbr.rel (%p373) target = $region52
        $region51: #{tpu_custom_call.1} parent=47 // pred_region
          %377 = dma.done %s369, 128
        $region52: #{tpu_custom_call.1} parent=47 // pred_fallthru
          _
        %s378 = sand.u32 %s29, 1
        %s379 = scalar_lea.sflag [#allocation7], %s378
        %s380 = sand.u32 %s77, 1
        %s381 = smul.addr %s380, 8
        %s382 = scalar_lea.vmem [#allocation6], %s381
        // Predicated region
        $region53: #{tpu_custom_call.1} parent=47 // pred_check
          %p383 = pneg %p90
        $region54: #{tpu_custom_call.1} parent=47 // pred_check_branch
          %385 = sbr.rel (%p383) target = $region56
        $region55: #{tpu_custom_call.1} parent=47 // pred_region
          %387 = dma.done %s379, 128
        $region56: #{tpu_custom_call.1} parent=47 // pred_fallthru
          _
        %s388 = sand.u32 %s29, 1
        %s389 = scalar_lea.sflag [#allocation7], %s388
        %s390 = sand.u32 %s103, 1
        %s391 = smul.addr %s390, 8
        %s392 = scalar_lea.vmem [#allocation8], %s391
        // Predicated region
        $region57: #{tpu_custom_call.1} parent=47 // pred_check
          %p393 = pneg %p116
        $region58: #{tpu_custom_call.1} parent=47 // pred_check_branch
          %395 = sbr.rel (%p393) target = $region60
        $region59: #{tpu_custom_call.1} parent=47 // pred_region
          %397 = dma.done %s389, 128
        $region60: #{tpu_custom_call.1} parent=47 // pred_fallthru
          _
        // Predicated region
        $region61: #{tpu_custom_call.1} parent=47 // pred_check
          %p398 = pneg %p137
        $region62: #{tpu_custom_call.1} parent=47 // pred_check_branch
          %400 = sbr.rel (%p398) target = $region64
        $region63: #{tpu_custom_call.1} parent=47 // pred_region
          %402 = dma.done [#allocation10], 512
        $region64: #{tpu_custom_call.1} parent=47 // pred_fallthru
          _
        // Predicated region
        $region65: #{tpu_custom_call.1} parent=47 // pred_check
          %p403 = pneg %p158
        $region66: #{tpu_custom_call.1} parent=47 // pred_check_branch
          %405 = sbr.rel (%p403) target = $region68
        $region67: #{tpu_custom_call.1} parent=47 // pred_region
          %407 = dma.done [#allocation10], 512
        $region68: #{tpu_custom_call.1} parent=47 // pred_fallthru
          _
        // Predicated region
        $region69: #{tpu_custom_call.1} parent=47 // pred_check
          %p408 = pneg %p179
        $region70: #{tpu_custom_call.1} parent=47 // pred_check_branch
          %410 = sbr.rel (%p408) target = $region72
        $region71: #{tpu_custom_call.1} parent=47 // pred_region
          %412 = dma.done [#allocation13], 512
        $region72: #{tpu_custom_call.1} parent=47 // pred_fallthru
          _
        // Predicated region
        $region73: #{tpu_custom_call.1} parent=47 // pred_check
          %p413 = pneg %p200
        $region74: #{tpu_custom_call.1} parent=47 // pred_check_branch
          %415 = sbr.rel (%p413) target = $region76
        $region75: #{tpu_custom_call.1} parent=47 // pred_region
          %417 = dma.done [#allocation13], 4096
        $region76: #{tpu_custom_call.1} parent=47 // pred_fallthru
          _
        %s418 = sand.u32 %s51, 1
        %s419 = scalar_lea.sflag [#allocation4], %s418
        %s420 = sand.u32 %s51, 1
        %s421 = smul.addr %s420, 8
        %s422 = scalar_lea.vmem [#allocation3], %s421
        %p423 = pneg %p64
        %p424 = pneg %p61
        %s425 = sand.u32 %s29, 1
        %s426 = scalar_lea.sflag [#allocation7], %s425
        %s427 = sand.u32 %s77, 1
        %s428 = smul.addr %s427, 8
        %s429 = scalar_lea.vmem [#allocation6], %s428
        %p430 = pneg %p90
        %p431 = pneg %p87
        %s432 = sand.u32 %s29, 1
        %s433 = scalar_lea.sflag [#allocation7], %s432
        %s434 = sand.u32 %s103, 1
        %s435 = smul.addr %s434, 8
        %s436 = scalar_lea.vmem [#allocation8], %s435
        %p437 = pneg %p116
        %p438 = pneg %p113
        %p439 = pneg %p137
        %p440 = pneg %p134
        %p441 = pneg %p158
        %p442 = pneg %p155
        %p443 = pneg %p179
        %p444 = pneg %p176
        %p445 = pneg %p200
        %p446 = pneg %p197
        %p447 = pneg %p228
        %p448 = pneg %p225
        %s449 = sand.u32 %s215, 1
        %s450 = scalar_lea.sflag [#allocation5], %s449
        %s451 = sand.u32 %s215, 1
        %s452 = smul.addr %s451, 8
        %s453 = scalar_lea.vmem [#allocation15], %s452
        %v454 = vld [vmem:[%s372] sm:$0xff]
        %v455 = vld [vmem:[%s382] sm:$0xff]
        %v456 = vld [vmem:[%s392] sm:$0xff]
        %v457 = vld [vmem:[#allocation9] sm:$0xff]
        %v458 = vld [vmem:[#allocation9 + $0x8] sm:$0xff]
        %v459 = vld [vmem:[#allocation9 + $0x10] sm:$0xff]
        %v460 = vld [vmem:[#allocation9 + $0x18] sm:$0xff]
        %vm461 = vcmask 130048
        %v463 = vsel %vm461, %v454, 0
        %465 = vmatpush.msra.mxu0 0.0
        %466 = vmatpush.msra.mxu0 0.0
        %467 = vmatpush.msra.mxu0 0.0
        %468 = vmatpush.msra.mxu0 0.0
        %469 = vmatpush.msra.mxu0 0.0
        %470 = vmatpush.msra.mxu0 0.0
        %471 = vmatpush.msra.mxu0 0.0
        %472 = vmatpush.msra.mxu0 0.0
        %473 = vmatpush.msra.mxu0 0.0
        %474 = vmatpush.msra.mxu0 0.0
        %475 = vmatpush.msra.mxu0 0.0
        %476 = vmatpush.msra.mxu0 0.0
        %477 = vmatpush.msra.mxu0 0.0
        %478 = vmatpush.msra.mxu0 0.0
        %479 = vmatpush.msra.mxu0 %v459
        %480 = vmatpush.msra.mxu0 %v457
        %481 = vmatmul.f32.gmra.mxu0 %v463
        %v482 = vpop.f32.mrf.mxu0
        %v483 = vadd.f32 0.0, %v482
        %484 = vdwg.mxu0
        %485 = vmatpush.msra.mxu0 0.0
        %486 = vmatpush.msra.mxu0 0.0
        %487 = vmatpush.msra.mxu0 0.0
        %488 = vmatpush.msra.mxu0 0.0
        %489 = vmatpush.msra.mxu0 0.0
        %490 = vmatpush.msra.mxu0 0.0
        %491 = vmatpush.msra.mxu0 0.0
        %492 = vmatpush.msra.mxu0 0.0
        %493 = vmatpush.msra.mxu0 0.0
        %494 = vmatpush.msra.mxu0 0.0
        %495 = vmatpush.msra.mxu0 0.0
        %496 = vmatpush.msra.mxu0 0.0
        %497 = vmatpush.msra.mxu0 0.0
        %498 = vmatpush.msra.mxu0 0.0
        %499 = vmatpush.msra.mxu0 %v460
        %500 = vmatpush.msra.mxu0 %v458
        %501 = vmatmul.f32.gmra.mxu0 %v463
        %v502 = vpop.f32.mrf.mxu0
        %v503 = vadd.f32 0.0, %v502
        %504 = vdwg.mxu0
        %v505 = vld [vmem:[#allocation11] sm:$0xff]
        %v506 = vld [vmem:[#allocation11 + $0x8] sm:$0xff]
        %v507 = vld [vmem:[#allocation11 + $0x10] sm:$0xff]
        %v508 = vld [vmem:[#allocation11 + $0x18] sm:$0xff]
        %v510 = vsel %vm461, %v455, 0
        %512 = vmatpush.msra.mxu0 0.0
        %513 = vmatpush.msra.mxu0 0.0
        %514 = vmatpush.msra.mxu0 0.0
        %515 = vmatpush.msra.mxu0 0.0
        %516 = vmatpush.msra.mxu0 0.0
        %517 = vmatpush.msra.mxu0 0.0
        %518 = vmatpush.msra.mxu0 0.0
        %519 = vmatpush.msra.mxu0 0.0
        %520 = vmatpush.msra.mxu0 0.0
        %521 = vmatpush.msra.mxu0 0.0
        %522 = vmatpush.msra.mxu0 0.0
        %523 = vmatpush.msra.mxu0 0.0
        %524 = vmatpush.msra.mxu0 0.0
        %525 = vmatpush.msra.mxu0 0.0
        %526 = vmatpush.msra.mxu0 %v507
        %527 = vmatpush.msra.mxu0 %v505
        %528 = vmatmul.f32.gmra.mxu0 %v510
        %v529 = vpop.f32.mrf.mxu0
        %v530 = vadd.f32 0.0, %v529
        %531 = vdwg.mxu0
        %532 = vmatpush.msra.mxu0 0.0
        %533 = vmatpush.msra.mxu0 0.0
        %534 = vmatpush.msra.mxu0 0.0
        %535 = vmatpush.msra.mxu0 0.0
        %536 = vmatpush.msra.mxu0 0.0
        %537 = vmatpush.msra.mxu0 0.0
        %538 = vmatpush.msra.mxu0 0.0
        %539 = vmatpush.msra.mxu0 0.0
        %540 = vmatpush.msra.mxu0 0.0
        %541 = vmatpush.msra.mxu0 0.0
        %542 = vmatpush.msra.mxu0 0.0
        %543 = vmatpush.msra.mxu0 0.0
        %544 = vmatpush.msra.mxu0 0.0
        %545 = vmatpush.msra.mxu0 0.0
        %546 = vmatpush.msra.mxu0 %v508
        %547 = vmatpush.msra.mxu0 %v506
        %548 = vmatmul.f32.gmra.mxu0 %v510
        %v549 = vpop.f32.mrf.mxu0
        %v550 = vadd.f32 0.0, %v549
        %551 = vdwg.mxu0
        %v552 = vld [vmem:[#allocation12] sm:$0xff]
        %v553 = vld [vmem:[#allocation12 + $0x8] sm:$0xff]
        %v554 = vld [vmem:[#allocation12 + $0x10] sm:$0xff]
        %v555 = vld [vmem:[#allocation12 + $0x18] sm:$0xff]
        %v557 = vsel %vm461, %v456, 0
        %559 = vmatpush.msra.mxu0 0.0
        %560 = vmatpush.msra.mxu0 0.0
        %561 = vmatpush.msra.mxu0 0.0
        %562 = vmatpush.msra.mxu0 0.0
        %563 = vmatpush.msra.mxu0 0.0
        %564 = vmatpush.msra.mxu0 0.0
        %565 = vmatpush.msra.mxu0 0.0
        %566 = vmatpush.msra.mxu0 0.0
        %567 = vmatpush.msra.mxu0 0.0
        %568 = vmatpush.msra.mxu0 0.0
        %569 = vmatpush.msra.mxu0 0.0
        %570 = vmatpush.msra.mxu0 0.0
        %571 = vmatpush.msra.mxu0 0.0
        %572 = vmatpush.msra.mxu0 0.0
        %573 = vmatpush.msra.mxu0 %v554
        %574 = vmatpush.msra.mxu0 %v552
        %575 = vmatmul.f32.gmra.mxu0 %v557
        %v576 = vpop.f32.mrf.mxu0
        %v577 = vadd.f32 0.0, %v576
        %578 = vdwg.mxu0
        %579 = vmatpush.msra.mxu0 0.0
        %580 = vmatpush.msra.mxu0 0.0
        %581 = vmatpush.msra.mxu0 0.0
        %582 = vmatpush.msra.mxu0 0.0
        %583 = vmatpush.msra.mxu0 0.0
        %584 = vmatpush.msra.mxu0 0.0
        %585 = vmatpush.msra.mxu0 0.0
        %586 = vmatpush.msra.mxu0 0.0
        %587 = vmatpush.msra.mxu0 0.0
        %588 = vmatpush.msra.mxu0 0.0
        %589 = vmatpush.msra.mxu0 0.0
        %590 = vmatpush.msra.mxu0 0.0
        %591 = vmatpush.msra.mxu0 0.0
        %592 = vmatpush.msra.mxu0 0.0
        %593 = vmatpush.msra.mxu0 %v555
        %594 = vmatpush.msra.mxu0 %v553
        %595 = vmatmul.f32.gmra.mxu0 %v557
        %v596 = vpop.f32.mrf.mxu0
        %v597 = vadd.f32 0.0, %v596
        %598 = vdwg.mxu0
        %599 = vmatpush.xpose.msra.mxu0 0.0
        %600 = vmatpush.xpose.msra.mxu0 0.0
        %601 = vmatpush.xpose.msra.mxu0 0.0
        %602 = vmatpush.xpose.msra.mxu0 0.0
        %603 = vmatpush.xpose.msra.mxu0 0.0
        %604 = vmatpush.xpose.msra.mxu0 0.0
        %605 = vmatpush.xpose.msra.mxu0 0.0
        %606 = vmatpush.xpose.msra.mxu0 0.0
        %607 = vmatpush.xpose.msra.mxu0 0.0
        %608 = vmatpush.xpose.msra.mxu0 0.0
        %609 = vmatpush.xpose.msra.mxu0 0.0
        %610 = vmatpush.xpose.msra.mxu0 0.0
        %611 = vmatpush.xpose.msra.mxu0 0.0
        %612 = vmatpush.xpose.msra.mxu0 0.0
        %613 = vmatpush.xpose.msra.mxu0 0.0
        %614 = vmatpush.xpose.msra.mxu0 %v530
        %615 = vmatmul.f32.gmra.mxu0 %v483
        %v616 = vpop.f32.mrf.mxu0
        %v617 = vadd.f32 0.0, %v616
        %618 = vdwg.mxu0
        %vm619 = vcmask 64512
        %v620 = vsel %vm619, %v617, -inf
        %621 = vmax.xlane.f32.xlu0 %v620
        %v622 = vpop.xlane.xlu0 %621
        %v623 = vsub.f32 %v617, %v622
        %v624 = vmul.f32 %v623, 1.442695
        %v625 = vpow.pop %v624
        %v626 = vsel %vm619, %v625, 0.0
        %627 = vadd.xlane.f32.xlu0 %v626
        %v628 = vpop.xlane.xlu0 %627
        %v629 = vrcp.pop %v628
        %v630 = vmul.f32 %v625, %v629
        %v632 = vsel %vm619, %v630, 0
        %634 = vmatpush.msra.mxu0 0.0
        %635 = vmatpush.msra.mxu0 0.0
        %636 = vmatpush.msra.mxu0 0.0
        %637 = vmatpush.msra.mxu0 0.0
        %638 = vmatpush.msra.mxu0 0.0
        %639 = vmatpush.msra.mxu0 0.0
        %640 = vmatpush.msra.mxu0 0.0
        %641 = vmatpush.msra.mxu0 0.0
        %642 = vmatpush.msra.mxu0 0.0
        %643 = vmatpush.msra.mxu0 0.0
        %644 = vmatpush.msra.mxu0 0.0
        %645 = vmatpush.msra.mxu0 0.0
        %646 = vmatpush.msra.mxu0 0.0
        %647 = vmatpush.msra.mxu0 0.0
        %648 = vmatpush.msra.mxu0 0.0
        %649 = vmatpush.msra.mxu0 %v577
        %650 = vmatmul.f32.gmra.mxu0 %v632
        %v651 = vpop.f32.mrf.mxu0
        %v652 = vadd.f32 0.0, %v651
        %653 = vdwg.mxu0
        %654 = vst [vmem:[#allocation2] sm:$0xff] %v652
        %655 = vmatpush.xpose.msra.mxu0 0.0
        %656 = vmatpush.xpose.msra.mxu0 0.0
        %657 = vmatpush.xpose.msra.mxu0 0.0
        %658 = vmatpush.xpose.msra.mxu0 0.0
        %659 = vmatpush.xpose.msra.mxu0 0.0
        %660 = vmatpush.xpose.msra.mxu0 0.0
        %661 = vmatpush.xpose.msra.mxu0 0.0
        %662 = vmatpush.xpose.msra.mxu0 0.0
        %663 = vmatpush.xpose.msra.mxu0 0.0
        %664 = vmatpush.xpose.msra.mxu0 0.0
        %665 = vmatpush.xpose.msra.mxu0 0.0
        %666 = vmatpush.xpose.msra.mxu0 0.0
        %667 = vmatpush.xpose.msra.mxu0 0.0
        %668 = vmatpush.xpose.msra.mxu0 0.0
        %669 = vmatpush.xpose.msra.mxu0 0.0
        %670 = vmatpush.xpose.msra.mxu0 %v550
        %671 = vmatmul.f32.gmra.mxu0 %v503
        %v672 = vpop.f32.mrf.mxu0
        %v673 = vadd.f32 0.0, %v672
        %674 = vdwg.mxu0
        %v675 = vsel %vm619, %v673, -inf
        %676 = vmax.xlane.f32.xlu0 %v675
        %v677 = vpop.xlane.xlu0 %676
        %v678 = vsub.f32 %v673, %v677
        %v679 = vmul.f32 %v678, 1.442695
        %v680 = vpow.pop %v679
        %v681 = vsel %vm619, %v680, 0.0
        %682 = vadd.xlane.f32.xlu0 %v681
        %v683 = vpop.xlane.xlu0 %682
        %v684 = vrcp.pop %v683
        %v685 = vmul.f32 %v680, %v684
        %v687 = vsel %vm619, %v685, 0
        %689 = vmatpush.msra.mxu0 0.0
        %690 = vmatpush.msra.mxu0 0.0
        %691 = vmatpush.msra.mxu0 0.0
        %692 = vmatpush.msra.mxu0 0.0
        %693 = vmatpush.msra.mxu0 0.0
        %694 = vmatpush.msra.mxu0 0.0
        %695 = vmatpush.msra.mxu0 0.0
        %696 = vmatpush.msra.mxu0 0.0
        %697 = vmatpush.msra.mxu0 0.0
        %698 = vmatpush.msra.mxu0 0.0
        %699 = vmatpush.msra.mxu0 0.0
        %700 = vmatpush.msra.mxu0 0.0
        %701 = vmatpush.msra.mxu0 0.0
        %702 = vmatpush.msra.mxu0 0.0
        %703 = vmatpush.msra.mxu0 0.0
        %704 = vmatpush.msra.mxu0 %v597
        %705 = vmatmul.f32.gmra.mxu0 %v687
        %v706 = vpop.f32.mrf.mxu0
        %v707 = vadd.f32 0.0, %v706
        %708 = vdwg.mxu0
        %709 = vst [vmem:[#allocation2 + $0x8] sm:$0xff] %v707
        %v710 = vld [vmem:[#allocation2] sm:$0xff]
        %v711 = vld [vmem:[#allocation2 + $0x8] sm:$0xff]
        %v712 = vld [vmem:[#allocation14] sm:$0xff]
        %v713 = vld [vmem:[#allocation14 + $0x8] sm:$0xff]
        %v714 = vld [vmem:[#allocation14 + $0x10] sm:$0xff]
        %v715 = vld [vmem:[#allocation14 + $0x18] sm:$0xff]
        %v716 = vld [vmem:[#allocation14 + $0x20] sm:$0xff]
        %v717 = vld [vmem:[#allocation14 + $0x28] sm:$0xff]
        %v718 = vld [vmem:[#allocation14 + $0x30] sm:$0xff]
        %v719 = vld [vmem:[#allocation14 + $0x38] sm:$0xff]
        %v720 = vld [vmem:[#allocation14 + $0x40] sm:$0xff]
        %v721 = vld [vmem:[#allocation14 + $0x48] sm:$0xff]
        %v722 = vld [vmem:[#allocation14 + $0x50] sm:$0xff]
        %v723 = vld [vmem:[#allocation14 + $0x58] sm:$0xff]
        %v724 = vld [vmem:[#allocation14 + $0x60] sm:$0xff]
        %v725 = vld [vmem:[#allocation14 + $0x68] sm:$0xff]
        %v726 = vld [vmem:[#allocation14 + $0x70] sm:$0xff]
        %v727 = vld [vmem:[#allocation14 + $0x78] sm:$0xff]
        %v728 = vld [vmem:[#allocation14 + $0x80] sm:$0xff]
        %v729 = vld [vmem:[#allocation14 + $0x88] sm:$0xff]
        %v730 = vld [vmem:[#allocation14 + $0x90] sm:$0xff]
        %v731 = vld [vmem:[#allocation14 + $0x98] sm:$0xff]
        %v732 = vld [vmem:[#allocation14 + $0xa0] sm:$0xff]
        %v733 = vld [vmem:[#allocation14 + $0xa8] sm:$0xff]
        %v734 = vld [vmem:[#allocation14 + $0xb0] sm:$0xff]
        %v735 = vld [vmem:[#allocation14 + $0xb8] sm:$0xff]
        %v736 = vld [vmem:[#allocation14 + $0xc0] sm:$0xff]
        %v737 = vld [vmem:[#allocation14 + $0xc8] sm:$0xff]
        %v738 = vld [vmem:[#allocation14 + $0xd0] sm:$0xff]
        %v739 = vld [vmem:[#allocation14 + $0xd8] sm:$0xff]
        %v740 = vld [vmem:[#allocation14 + $0xe0] sm:$0xff]
        %v741 = vld [vmem:[#allocation14 + $0xe8] sm:$0xff]
        %v742 = vld [vmem:[#allocation14 + $0xf0] sm:$0xff]
        %v743 = vld [vmem:[#allocation14 + $0xf8] sm:$0xff]
        %744 = vmatpush.msra.mxu0 %v727
        %745 = vmatpush.msra.mxu0 %v726
        %746 = vmatpush.msra.mxu0 %v725
        %747 = vmatpush.msra.mxu0 %v724
        %748 = vmatpush.msra.mxu0 %v723
        %749 = vmatpush.msra.mxu0 %v722
        %750 = vmatpush.msra.mxu0 %v721
        %751 = vmatpush.msra.mxu0 %v720
        %752 = vmatpush.msra.mxu0 %v719
        %753 = vmatpush.msra.mxu0 %v718
        %754 = vmatpush.msra.mxu0 %v717
        %755 = vmatpush.msra.mxu0 %v716
        %756 = vmatpush.msra.mxu0 %v715
        %757 = vmatpush.msra.mxu0 %v714
        %758 = vmatpush.msra.mxu0 %v713
        %759 = vmatpush.msra.mxu0 %v712
        %760 = vmatmul.f32.gmra.mxu0 %v710
        %v761 = vpop.f32.mrf.mxu0
        %v762 = vadd.f32 0.0, %v761
        %763 = vdwg.mxu0
        %764 = vmatpush.msra.mxu0 %v743
        %765 = vmatpush.msra.mxu0 %v742
        %766 = vmatpush.msra.mxu0 %v741
        %767 = vmatpush.msra.mxu0 %v740
        %768 = vmatpush.msra.mxu0 %v739
        %769 = vmatpush.msra.mxu0 %v738
        %770 = vmatpush.msra.mxu0 %v737
        %771 = vmatpush.msra.mxu0 %v736
        %772 = vmatpush.msra.mxu0 %v735
        %773 = vmatpush.msra.mxu0 %v734
        %774 = vmatpush.msra.mxu0 %v733
        %775 = vmatpush.msra.mxu0 %v732
        %776 = vmatpush.msra.mxu0 %v731
        %777 = vmatpush.msra.mxu0 %v730
        %778 = vmatpush.msra.mxu0 %v729
        %779 = vmatpush.msra.mxu0 %v728
        %780 = vmatmul.f32.gmra.mxu0 %v711
        %v781 = vpop.f32.mrf.mxu0
        %v782 = vadd.f32 %v762, %v781
        %783 = vdwg.mxu0
        %784 = vst [vmem:[%s453] sm:$0xff] %v782
        %s785 = sand.u32 %s215, 1
        %s786 = scalar_lea.sflag [#allocation5], %s785
        %s787 = sand.u32 %s215, 1
        %s788 = smul.addr %s787, 8
        %s789 = scalar_lea.vmem [#allocation15], %s788
        // Predicated region
        $region77: #{tpu_custom_call.1} parent=47 // pred_check
          %p790 = pneg %p225
        $region78: #{tpu_custom_call.1} parent=47 // pred_check_branch
          %792 = sbr.rel (%p790) target = $region80
        $region79: #{tpu_custom_call.1} parent=47 // pred_region
          %794 = vsyncadd %s786, 0
          %s795 = sadd.s32 %s34, %s33
          %s796 = smul.addr %s795, 8
          %s797 = scalar_lea.hbm %s7, %s796
          %s799 = sshll.u32 %s789, 4
          %s800 = int_to_ptr.vmem [resolvable:$true] %s799
          %s801 = sshll.u32 %s797, 4
          %s802 = int_to_ptr.hbm [resolvable:$true] %s801
          %804 = dma.vmem_to_hbm [thread:$0]  %s800, 128, %s802, %s786
        $region80: #{tpu_custom_call.1} parent=47 // pred_fallthru
          _
      $region48: #{tpu_custom_call.1} parent=5 // pred_fallthru
        _
      %p805 = scmp.le.s32.totalorder 2, %s24
      // Predicated region
      $region81: #{tpu_custom_call.1} parent=5 // pred_check
        %p806 = pneg %p805
      $region82: #{tpu_custom_call.1} parent=5 // pred_check_branch
        %808 = sbr.rel (%p806) target = $region84
      $region83: #{tpu_custom_call.1} parent=5 // pred_region
        %s809 = ssub.s32 %s24, 2
        // Predicated region
        $region85: #{tpu_custom_call.1} parent=83 // pred_check
          %p810 = pneg %p231
        $region86: #{tpu_custom_call.1} parent=83 // pred_check_branch
          %812 = sbr.rel (%p810) target = $region88
        $region87: #{tpu_custom_call.1} parent=83 // pred_region
          %s813 = sand.u32 %s216, 1
          %s814 = scalar_lea.sflag [#allocation5], %s813
          %s815 = sand.u32 %s216, 1
          %s816 = smul.addr %s815, 8
          %s817 = scalar_lea.vmem [#allocation15], %s816
          %819 = dma.done %s814, 128
        $region88: #{tpu_custom_call.1} parent=83 // pred_fallthru
          _
      $region84: #{tpu_custom_call.1} parent=5 // pred_fallthru
        _
    $region6: #{tpu_custom_call.1} parent=1 // loop_footer
      %s28 = sadd.s32 1, %s24
    $region7: #{tpu_custom_call.1} parent=1 // loop_footer_branch
      %23 = sbr.rel target = $region3
    $region8: #{tpu_custom_call.1} parent=1 // loop_exit
      _
    %820 = vsyncpa [#allocation4], 1
    %s821 = scalar_lea.sflag [#allocation4], 1
    %822 = vsyncpa %s821, 1
    %823 = vsyncpa [#allocation7], 1
    %s824 = scalar_lea.sflag [#allocation7], 1
    %825 = vsyncpa %s824, 1
    %826 = vsyncpa [#allocation10], 1
    %827 = vsyncpa [#allocation13], 1
    %828 = vsyncpa [#allocation5], 1
    %s829 = scalar_lea.sflag [#allocation5], 1
    %830 = vsyncpa %s829, 1

</llo_original>
